<compile_context>
chip_gen: v7x
topology: tpu7x:2x2x1
jax: 0.10.0
libtpu: 0.0.40
codegen_flags: <defaults>
</compile_context>

<pallas_src>
import functools
import math

import jax
import jax.numpy as jnp
from jax.experimental import pallas as pl
from jax.experimental.pallas import tpu as pltpu


_LOG2_E = 1.4426950408889634      # exp(x) == exp2(x * log2 e)
_NEG_BIG = -1e30                  # finite "minus infinity" (avoids inf - inf -> NaN)
_LANES = 128                      # lane width; m/l scratch replicated per head


def _heads_per_group(heads, dim_head):
    """Smallest head group whose packed width is a multiple of 128 lanes (or all heads)."""
    inner = heads * dim_head
    if inner <= _LANES:
        return heads                              # block == full inner dim
    g = _LANES // math.gcd(dim_head, _LANES)
    if g <= heads and heads % g == 0:
        return g
    # Fallback: one group packing all heads (block width == full inner dim). Correct,
    # but output stores may be masked if inner is not a multiple of 128.
    return heads


def _attn_single_kv_kernel(q_ref, k_ref, v_ref, o_ref, *,
                           dim_head, heads_per_group, q_scale):
    """One (batch, head-group, q-tile) block with ALL of K/V resident: plain softmax,
    no online-softmax state, no scratch, no init/finalize branches."""
    d = dim_head
    q = q_ref[0]                                   # (tq, G*d), log2-scaled via Wq fold
    if q_scale is not None:                        # fallback path only
        q = q * q_scale
    k = k_ref[0]
    v = v_ref[0]

    outs = []
    for g in range(heads_per_group):               # static unroll; G <= 8 for realistic dims
        hs = slice(g * d, (g + 1) * d)
        # sim = q_g @ k_g^T, contracting last dims -> no explicit K transpose/relayout.
        s = jax.lax.dot_general(
            q[:, hs], k[:, hs],
            dimension_numbers=(((1,), (1,)), ((), ())),
            preferred_element_type=jnp.float32)    # (tq, Nk) fp32, log2 domain
        m = jnp.max(s, axis=-1, keepdims=True)
        p = jnp.exp2(s - m)
        l = jnp.sum(p, axis=-1, keepdims=True)
        inv = pl.reciprocal(l, approx=True)        # EUP slot (off the VALU path)
        inv = inv * (2.0 - l * inv)                # one Newton step on (tq, 1)
        outs.append(jnp.dot(p.astype(v.dtype), v[:, hs],
                            preferred_element_type=jnp.float32) * inv)
    out = outs[0] if len(outs) == 1 else jnp.concatenate(outs, axis=-1)
    o_ref[0] = out.astype(o_ref.dtype)             # lane-dense (tq, G*d) store


def _flash_attn_kernel(q_ref, k_ref, v_ref, o_ref, m_ref, l_ref, acc_ref, *,
                       dim_head, heads_per_group, q_scale, nk_total, block_k, mask_k):
    """Flash/online-softmax step for one (batch, head-group, q-tile, k-tile) block."""
    d = dim_head
    G = heads_per_group
    ki = pl.program_id(3)

    @pl.when(ki == 0)
    def _init():
        m_ref[...] = jnp.full(m_ref.shape, _NEG_BIG, jnp.float32)
        l_ref[...] = jnp.zeros(l_ref.shape, jnp.float32)
        acc_ref[...] = jnp.zeros(acc_ref.shape, jnp.float32)

    q = q_ref[0]                                    # (tq, G*d), log2-scaled via Wq fold
    if q_scale is not None:                         # fallback path only
        q = q * q_scale
    k = k_ref[0]                                    # (tk, G*d)
    v = v_ref[0]

    # Nk-padding mask, hoisted out of the per-head loop (emitted only when Nk % tk != 0).
    if mask_k:
        base = ki * block_k
        kvalid_row = (base + jax.lax.broadcasted_iota(
            jnp.int32, (1, k.shape[0]), 1)) < nk_total          # (1, tk) for score mask
        kvalid_col = (base + jax.lax.broadcasted_iota(
            jnp.int32, (k.shape[0], 1), 0)) < nk_total          # (tk, 1) for V zeroing
        v = jnp.where(kvalid_col, v, jnp.zeros_like(v))         # 0 * garbage can't poison P.V

    # Single full-width scratch reads per grid step (lane-dense, unmasked vld).
    m_prev_all = m_ref[...]                         # (tq, G*128), replicated per head
    l_prev_all = l_ref[...]
    acc_prev_all = acc_ref[...]                     # (tq, G*d)

    m_new_all, l_new_all, acc_new_all = [], [], []
    for g in range(G):                              # static unroll; G <= 8 for realistic dims
        hs = slice(g * d, (g + 1) * d)
        ls = slice(g * _LANES, (g + 1) * _LANES)

        s = jax.lax.dot_general(
            q[:, hs], k[:, hs],
            dimension_numbers=(((1,), (1,)), ((), ())),
            preferred_element_type=jnp.float32)     # (tq, tk) fp32, log2 domain
        if mask_k:
            s = jnp.where(kvalid_row, s, _NEG_BIG)

        m_prev = m_prev_all[:, ls]                  # (tq, 128) replicated
        l_prev = l_prev_all[:, ls]
        m_cur = jnp.max(s, axis=-1, keepdims=True)  # (tq, 1)
        m_new = jnp.maximum(m_prev, m_cur)          # (tq, 128)
        alpha = jnp.exp2(m_prev - m_new)            # (tq, 128)
        p = jnp.exp2(s - m_new[:, :1])              # (tq, tk)
        l_new = alpha * l_prev + jnp.sum(p, axis=-1, keepdims=True)
        acc_new = (alpha[:, :1] * acc_prev_all[:, hs]
                   + jnp.dot(p.astype(v.dtype), v[:, hs],
                             preferred_element_type=jnp.float32))

        m_new_all.append(m_new)
        l_new_all.append(l_new)
        acc_new_all.append(acc_new)

    def _cat(xs):
        return xs[0] if len(xs) == 1 else jnp.concatenate(xs, axis=-1)

    # Single full-width (lane-dense) scratch writes per grid step.
    m_ref[...] = _cat(m_new_all)
    l_ref[...] = _cat(l_new_all)
    acc_ref[...] = _cat(acc_new_all)

    @pl.when(ki == pl.num_programs(3) - 1)
    def _finalize():
        parts = []
        for g in range(G):
            l_g = jnp.maximum(l_new_all[g][:, :1], 1e-30)   # guard padded-q rows (no inf/NaN)
            inv = pl.reciprocal(l_g, approx=True)
            inv = inv * (2.0 - l_g * inv)
            parts.append(acc_new_all[g] * inv)
        o_ref[0] = _cat(parts).astype(o_ref.dtype)          # one lane-dense (tq, G*d) store


def flash_cross_attention(q, k, v, *, heads, dim_head, scale=None,
                          block_q=1024, block_k=512, max_resident_q=1024):
    """q: (B, Nq, h*d), k/v: (B, Nk, h*d) -> (B, Nq, h*d) merged-head attention output.

    scale=None means q already carries (softmax_scale * log2 e), folded into the q
    projection weight; otherwise the kernel applies scale*log2(e) to the q block.
    """
    B, Nq, inner = q.shape
    Bk, Nk, inner_k = k.shape
    assert inner == heads * dim_head
    assert v.shape == k.shape and Bk == B and inner_k == inner

    G = _heads_per_group(heads, dim_head)
    gd = G * dim_head
    n_groups = heads // G
    q_scale = None if scale is None else float(scale) * _LOG2_E

    # q tile: full Nq when it fits (K/V then stream from HBM only once per head group);
    # otherwise a large multiple-of-8 tile (raises arithmetic intensity of K/V streaming).
    tq = Nq if Nq <= max_resident_q else block_q
    tk = Nk if Nk <= block_k else block_k
    nq_t = pl.cdiv(Nq, tq)
    nk_t = pl.cdiv(Nk, tk)
    mask_k = (Nk % tk) != 0

    # VMEM budget: double-buffered blocks + fp32 scratch + s/p temporaries, with margin;
    # floor at the 32 MiB scoped default, capped at v7x's 64 MiB physical VMEM.
    isz = jnp.dtype(q.dtype).itemsize
    blk_bytes = 2 * (2 * tq * gd * isz + 2 * tk * gd * isz)     # q+out, k+v (double-buffered)
    scratch_bytes = 0 if nk_t == 1 else 4 * (tq * gd + 2 * tq * _LANES * G)
    tmp_bytes = 2 * tq * tk * 4                                 # s / p fp32 temporaries
    vmem_need = blk_bytes + scratch_bytes + tmp_bytes
    vmem_limit = int(max(min(2 * vmem_need + (8 << 20), 64 << 20), 32 << 20))

    out_shape = jax.ShapeDtypeStruct((B, Nq, inner), q.dtype)

    if nk_t == 1:
        # Whole context fits one K/V tile (typical cross-attention): single pass,
        # no online-softmax state, no init/finalize, no rescale work.
        kernel = functools.partial(_attn_single_kv_kernel, dim_head=dim_head,
                                   heads_per_group=G, q_scale=q_scale)
        return pl.pallas_call(
            kernel,
            out_shape=out_shape,
            grid_spec=pltpu.PrefetchScalarGridSpec(
                num_scalar_prefetch=0,
                grid=(B, n_groups, nq_t),
                in_specs=[
                    pl.BlockSpec((1, tq, gd), lambda b, hg, qi: (b, qi, hg)),
                    pl.BlockSpec((1, tk, gd), lambda b, hg, qi: (b, 0, hg)),
                    pl.BlockSpec((1, tk, gd), lambda b, hg, qi: (b, 0, hg)),
                ],
                out_specs=pl.BlockSpec((1, tq, gd), lambda b, hg, qi: (b, qi, hg)),
            ),
            compiler_params=pltpu.CompilerParams(
                dimension_semantics=("parallel", "parallel", "parallel"),
                vmem_limit_bytes=vmem_limit,
            ),
        )(q, k, v)

    # Flash path: k-tile axis is the reduction (last, "arbitrary"); the rest shard
    # freely across TensorCores (B * n_groups * nq_t units of parallel work).
    # NOTE: K/V tiles are >= 256 rows by default; deeper K/V buffering (pl.Buffered(3))
    # could help v5e further but is left at the default double-buffering here.
    kernel = functools.partial(_flash_attn_kernel, dim_head=dim_head, heads_per_group=G,
                               q_scale=q_scale, nk_total=Nk, block_k=tk, mask_k=mask_k)
    return pl.pallas_call(
        kernel,
        out_shape=out_shape,
        grid_spec=pltpu.PrefetchScalarGridSpec(
            num_scalar_prefetch=0,
            grid=(B, n_groups, nq_t, nk_t),
            in_specs=[
                pl.BlockSpec((1, tq, gd), lambda b, hg, qi, ki: (b, qi, hg)),
                pl.BlockSpec((1, tk, gd), lambda b, hg, qi, ki: (b, ki, hg)),
                pl.BlockSpec((1, tk, gd), lambda b, hg, qi, ki: (b, ki, hg)),
            ],
            out_specs=pl.BlockSpec((1, tq, gd), lambda b, hg, qi, ki: (b, qi, hg)),
            scratch_shapes=[
                pltpu.VMEM((tq, G * _LANES), jnp.float32),   # running max (lane-dense, replicated)
                pltpu.VMEM((tq, G * _LANES), jnp.float32),   # running sum (lane-dense, replicated)
                pltpu.VMEM((tq, gd), jnp.float32),           # fp32 output accumulator
            ],
        ),
        compiler_params=pltpu.CompilerParams(
            dimension_semantics=("parallel", "parallel", "parallel", "arbitrary"),
            vmem_limit_bytes=vmem_limit,
        ),
    )(q, k, v)


class MemoryEfficientCrossAttentionPallas:
    """Mirror of the PyTorch MemoryEfficientCrossAttention (default forward path)."""

    def __init__(self, query_dim, context_dim=None, heads=8, dim_head=64, key=None):
        inner_dim = dim_head * heads
        context_dim = query_dim if context_dim is None else context_dim
        self.heads = heads
        self.dim_head = dim_head
        self.scale = dim_head ** (-0.5)

        key = jax.random.PRNGKey(0) if key is None else key
        k1, k2, k3, k4, k5 = jax.random.split(key, 5)
        s = 0.02
        # PyTorch nn.Linear stores weight as (out_features, in_features).
        self.Wq = s * jax.random.normal(k1, (inner_dim, query_dim), jnp.float32)
        self.Wk = s * jax.random.normal(k2, (inner_dim, context_dim), jnp.float32)
        self.Wv = s * jax.random.normal(k3, (inner_dim, context_dim), jnp.float32)
        self.Wo = s * jax.random.normal(k4, (query_dim, inner_dim), jnp.float32)
        self.bo = s * jax.random.normal(k5, (query_dim,), jnp.float32)

        # Fold softmax scale * log2(e) into the q projection once (free, constant):
        # the kernel then runs the softmax in the exp2 domain with no q multiply.
        self.Wq_eff = (self.scale * _LOG2_E) * self.Wq

    def __call__(self, x, context=None, mask=None):
        # x: (B, N, query_dim); context: (B, Nc, context_dim) or None (self-attn)
        assert mask is None  # TODO(synk): mask path raises NotImplementedError in torch too
        # TODO(synk): use_dialated_selfattn / attention_sf scale-rescale branches not implemented
        context = x if context is None else context
        dt = x.dtype

        # Projections (glue GEMMs; Linear bias=False => x @ W^T). Heads stay packed in
        # the last dim — the Pallas kernel slices them via BlockSpec (no transposes).
        q = x @ self.Wq_eff.T.astype(dt)       # (B, N,  h*d), already scale*log2e-scaled
        k = context @ self.Wk.T.astype(dt)     # (B, Nc, h*d)
        v = context @ self.Wv.T.astype(dt)     # (B, Nc, h*d)

        out = flash_cross_attention(q, k, v, heads=self.heads, dim_head=self.dim_head,
                                    scale=None)          # (B, N, h*d), heads merged

        # to_out: Linear(inner_dim, query_dim) + Dropout (identity at eval)
        return out @ self.Wo.T.astype(dt) + self.bo.astype(dt)


def _reference_attention(q, k, v, heads, dim_head, scale):
    """Pure-JAX multi-head attention on packed (B, N, h*d) projections."""
    B, Nq, _ = q.shape
    Nk = k.shape[1]
    qh = q.reshape(B, Nq, heads, dim_head).transpose(0, 2, 1, 3)
    kh = k.reshape(B, Nk, heads, dim_head).transpose(0, 2, 1, 3)
    vh = v.reshape(B, Nk, heads, dim_head).transpose(0, 2, 1, 3)
    sim = jnp.einsum('bhid,bhjd->bhij', qh, kh) * scale
    p = jax.nn.softmax(sim, axis=-1)
    o = jnp.einsum('bhij,bhjd->bhid', p, vh)
    return o.transpose(0, 2, 1, 3).reshape(B, Nq, heads * dim_head)


def _reference(x, context, attn):
    """Pure-JAX reference matching the torch module (unscaled weights, exp softmax)."""
    q = x @ attn.Wq.T
    k = context @ attn.Wk.T
    v = context @ attn.Wv.T
    o = _reference_attention(q, k, v, attn.heads, attn.dim_head, attn.scale)
    return o @ attn.Wo.T + attn.bo


if __name__ == "__main__":
    key = jax.random.PRNGKey(0)
    kx, kc, kp = jax.random.split(key, 3)

    B, N, Nc, query_dim = 2, 16, 24, 32
    heads, dim_head = 4, 8

    attn = MemoryEfficientCrossAttentionPallas(
        query_dim=query_dim, context_dim=query_dim, heads=heads, dim_head=dim_head, key=kp)

    x = jax.random.normal(kx, (B, N, query_dim), jnp.float32)
    ctx = jax.random.normal(kc, (B, Nc, query_dim), jnp.float32)

    # 1) self-attention (context=None), default forward path -> single-K/V-tile kernel
    y_self = attn(x)
    jax.block_until_ready(y_self)
    assert y_self.shape == (B, N, query_dim)
    assert jnp.allclose(y_self, _reference(x, x, attn), atol=1e-4, rtol=1e-3), "self-attn mismatch"

    # 2) cross-attention with an explicit context of a different length
    y_cross = attn(x, context=ctx)
    jax.block_until_ready(y_cross)
    assert y_cross.shape == (B, N, query_dim)
    assert jnp.allclose(y_cross, _reference(x, ctx, attn), atol=1e-4, rtol=1e-3), "cross-attn mismatch"

    # 3) exercise the multi-k-tile flash path (incl. a padded last K tile) and the
    #    in-kernel scale fallback, by forcing small block sizes.
    q_p = x @ attn.Wq.T
    k_p = ctx @ attn.Wk.T
    v_p = ctx @ attn.Wv.T
    y_flash = flash_cross_attention(q_p, k_p, v_p, heads=heads, dim_head=dim_head,
                                    scale=attn.scale, block_q=8, block_k=16,
                                    max_resident_q=0)
    jax.block_until_ready(y_flash)
    ref_attn = _reference_attention(q_p, k_p, v_p, heads, dim_head, attn.scale)
    assert jnp.allclose(y_flash, ref_attn, atol=1e-4, rtol=1e-3), "flash path mismatch"

    # 4) bf16 end-to-end run (MXU-friendly dtype on v6e/v7x), loose tolerance vs fp32 ref
    y_bf16 = attn(x.astype(jnp.bfloat16), context=ctx.astype(jnp.bfloat16))
    jax.block_until_ready(y_bf16)
    y_bf16_f32 = y_bf16.astype(jnp.float32)
    assert y_bf16.shape == (B, N, query_dim)
    assert bool(jnp.all(jnp.isfinite(y_bf16_f32)))
    assert jnp.allclose(y_bf16_f32, _reference(x, ctx, attn), atol=5e-2, rtol=5e-2), "bf16 mismatch"

    print("KERNEL_OK")
</pallas_src>

<mosaic_0001>
module attributes {stable_mosaic.version = 11 : i64} {
  func.func @_attn_single_kv_kernel(%arg0: i32, %arg1: i32, %arg2: i32, %arg3: memref<1x16x32xf32, #tpu.memory_space<vmem>>, %arg4: memref<1x16x32xf32, #tpu.memory_space<vmem>>, %arg5: memref<1x16x32xf32, #tpu.memory_space<vmem>>, %arg6: memref<1x16x32xf32, #tpu.memory_space<vmem>>) attributes {dimension_semantics = [#tpu.dimension_semantics<parallel>, #tpu.dimension_semantics<parallel>, #tpu.dimension_semantics<parallel>], iteration_bounds = array<i64: 2, 1, 1>, scalar_prefetch = 0 : i64, scratch_operands = 0 : i64, tpu.core_type = #tpu.core_type<tc>, window_params = [{transform_indices = @transform_0, window_bounds = array<i64: 1, 16, 32>}, {transform_indices = @transform_1, window_bounds = array<i64: 1, 16, 32>}, {transform_indices = @transform_2, window_bounds = array<i64: 1, 16, 32>}, {transform_indices = @transform_3, window_bounds = array<i64: 1, 16, 32>}]} {
    %c0 = arith.constant 0 : index
    %c0_0 = arith.constant 0 : index
    %c0_1 = arith.constant 0 : index
    %0 = vector.load %arg3[%c0, %c0_0, %c0_1] : memref<1x16x32xf32, #tpu.memory_space<vmem>>, vector<1x16x32xf32>
    %1 = vector.shape_cast %0 : vector<1x16x32xf32> to vector<16x32xf32>
    %c0_2 = arith.constant 0 : index
    %c0_3 = arith.constant 0 : index
    %c0_4 = arith.constant 0 : index
    %2 = vector.load %arg4[%c0_2, %c0_3, %c0_4] : memref<1x16x32xf32, #tpu.memory_space<vmem>>, vector<1x16x32xf32>
    %3 = vector.shape_cast %2 : vector<1x16x32xf32> to vector<16x32xf32>
    %c0_5 = arith.constant 0 : index
    %c0_6 = arith.constant 0 : index
    %c0_7 = arith.constant 0 : index
    %4 = vector.load %arg5[%c0_5, %c0_6, %c0_7] : memref<1x16x32xf32, #tpu.memory_space<vmem>>, vector<1x16x32xf32>
    %5 = vector.shape_cast %4 : vector<1x16x32xf32> to vector<16x32xf32>
    %6 = vector.extract_strided_slice %1 {offsets = [0, 0], sizes = [16, 8], strides = [1, 1]} : vector<16x32xf32> to vector<16x8xf32>
    %7 = vector.extract_strided_slice %3 {offsets = [0, 0], sizes = [16, 8], strides = [1, 1]} : vector<16x32xf32> to vector<16x8xf32>
    %cst = arith.constant dense<0.000000e+00> : vector<16x16xf32>
    %8 = tpu.matmul %6, %7, %cst {dimension_numbers = #tpu.dot_dimension_numbers<[1], [1], [0], [0], [0, 0, 1, 0], [], []>} : vector<16x8xf32>, vector<16x8xf32>, vector<16x16xf32> -> vector<16x16xf32>
    %cst_8 = arith.constant dense<0xFF800000> : vector<16xf32>
    %9 = vector.multi_reduction <maximumf>, %8, %cst_8 [1] : vector<16x16xf32> to vector<16xf32>
    %10 = vector.shape_cast %9 : vector<16xf32> to vector<16x1xf32>
    %11 = vector.broadcast %10 : vector<16x1xf32> to vector<16x16xf32>
    %12 = arith.subf %8, %11 : vector<16x16xf32>
    %13 = math.exp2 %12 : vector<16x16xf32>
    %cst_9 = arith.constant dense<0.000000e+00> : vector<16xf32>
    %14 = vector.multi_reduction <add>, %13, %cst_9 [1] : vector<16x16xf32> to vector<16xf32>
    %15 = vector.shape_cast %14 : vector<16xf32> to vector<16x1xf32>
    %16 = tpu.reciprocal %15 {approx = true} : vector<16x1xf32> -> vector<16x1xf32>
    %17 = arith.mulf %15, %16 : vector<16x1xf32>
    %cst_10 = arith.constant 2.000000e+00 : f32
    %18 = vector.broadcast %cst_10 : f32 to vector<16x1xf32>
    %19 = arith.subf %18, %17 : vector<16x1xf32>
    %20 = arith.mulf %16, %19 : vector<16x1xf32>
    %21 = vector.extract_strided_slice %5 {offsets = [0, 0], sizes = [16, 8], strides = [1, 1]} : vector<16x32xf32> to vector<16x8xf32>
    %cst_11 = arith.constant dense<0.000000e+00> : vector<16x8xf32>
    %22 = tpu.matmul %13, %21, %cst_11 {dimension_numbers = #tpu.dot_dimension_numbers<[1], [0], [0], [1], [0, 0, 1, 1], [], []>} : vector<16x16xf32>, vector<16x8xf32>, vector<16x8xf32> -> vector<16x8xf32>
    %23 = vector.broadcast %20 : vector<16x1xf32> to vector<16x8xf32>
    %24 = arith.mulf %22, %23 : vector<16x8xf32>
    %25 = vector.extract_strided_slice %1 {offsets = [0, 8], sizes = [16, 8], strides = [1, 1]} : vector<16x32xf32> to vector<16x8xf32>
    %26 = vector.extract_strided_slice %3 {offsets = [0, 8], sizes = [16, 8], strides = [1, 1]} : vector<16x32xf32> to vector<16x8xf32>
    %cst_12 = arith.constant dense<0.000000e+00> : vector<16x16xf32>
    %27 = tpu.matmul %25, %26, %cst_12 {dimension_numbers = #tpu.dot_dimension_numbers<[1], [1], [0], [0], [0, 0, 1, 0], [], []>} : vector<16x8xf32>, vector<16x8xf32>, vector<16x16xf32> -> vector<16x16xf32>
    %cst_13 = arith.constant dense<0xFF800000> : vector<16xf32>
    %28 = vector.multi_reduction <maximumf>, %27, %cst_13 [1] : vector<16x16xf32> to vector<16xf32>
    %29 = vector.shape_cast %28 : vector<16xf32> to vector<16x1xf32>
    %30 = vector.broadcast %29 : vector<16x1xf32> to vector<16x16xf32>
    %31 = arith.subf %27, %30 : vector<16x16xf32>
    %32 = math.exp2 %31 : vector<16x16xf32>
    %cst_14 = arith.constant dense<0.000000e+00> : vector<16xf32>
    %33 = vector.multi_reduction <add>, %32, %cst_14 [1] : vector<16x16xf32> to vector<16xf32>
    %34 = vector.shape_cast %33 : vector<16xf32> to vector<16x1xf32>
    %35 = tpu.reciprocal %34 {approx = true} : vector<16x1xf32> -> vector<16x1xf32>
    %36 = arith.mulf %34, %35 : vector<16x1xf32>
    %cst_15 = arith.constant 2.000000e+00 : f32
    %37 = vector.broadcast %cst_15 : f32 to vector<16x1xf32>
    %38 = arith.subf %37, %36 : vector<16x1xf32>
    %39 = arith.mulf %35, %38 : vector<16x1xf32>
    %40 = vector.extract_strided_slice %5 {offsets = [0, 8], sizes = [16, 8], strides = [1, 1]} : vector<16x32xf32> to vector<16x8xf32>
    %cst_16 = arith.constant dense<0.000000e+00> : vector<16x8xf32>
    %41 = tpu.matmul %32, %40, %cst_16 {dimension_numbers = #tpu.dot_dimension_numbers<[1], [0], [0], [1], [0, 0, 1, 1], [], []>} : vector<16x16xf32>, vector<16x8xf32>, vector<16x8xf32> -> vector<16x8xf32>
    %42 = vector.broadcast %39 : vector<16x1xf32> to vector<16x8xf32>
    %43 = arith.mulf %41, %42 : vector<16x8xf32>
    %44 = vector.extract_strided_slice %1 {offsets = [0, 16], sizes = [16, 8], strides = [1, 1]} : vector<16x32xf32> to vector<16x8xf32>
    %45 = vector.extract_strided_slice %3 {offsets = [0, 16], sizes = [16, 8], strides = [1, 1]} : vector<16x32xf32> to vector<16x8xf32>
    %cst_17 = arith.constant dense<0.000000e+00> : vector<16x16xf32>
    %46 = tpu.matmul %44, %45, %cst_17 {dimension_numbers = #tpu.dot_dimension_numbers<[1], [1], [0], [0], [0, 0, 1, 0], [], []>} : vector<16x8xf32>, vector<16x8xf32>, vector<16x16xf32> -> vector<16x16xf32>
    %cst_18 = arith.constant dense<0xFF800000> : vector<16xf32>
    %47 = vector.multi_reduction <maximumf>, %46, %cst_18 [1] : vector<16x16xf32> to vector<16xf32>
    %48 = vector.shape_cast %47 : vector<16xf32> to vector<16x1xf32>
    %49 = vector.broadcast %48 : vector<16x1xf32> to vector<16x16xf32>
    %50 = arith.subf %46, %49 : vector<16x16xf32>
    %51 = math.exp2 %50 : vector<16x16xf32>
    %cst_19 = arith.constant dense<0.000000e+00> : vector<16xf32>
    %52 = vector.multi_reduction <add>, %51, %cst_19 [1] : vector<16x16xf32> to vector<16xf32>
    %53 = vector.shape_cast %52 : vector<16xf32> to vector<16x1xf32>
    %54 = tpu.reciprocal %53 {approx = true} : vector<16x1xf32> -> vector<16x1xf32>
    %55 = arith.mulf %53, %54 : vector<16x1xf32>
    %cst_20 = arith.constant 2.000000e+00 : f32
    %56 = vector.broadcast %cst_20 : f32 to vector<16x1xf32>
    %57 = arith.subf %56, %55 : vector<16x1xf32>
    %58 = arith.mulf %54, %57 : vector<16x1xf32>
    %59 = vector.extract_strided_slice %5 {offsets = [0, 16], sizes = [16, 8], strides = [1, 1]} : vector<16x32xf32> to vector<16x8xf32>
    %cst_21 = arith.constant dense<0.000000e+00> : vector<16x8xf32>
    %60 = tpu.matmul %51, %59, %cst_21 {dimension_numbers = #tpu.dot_dimension_numbers<[1], [0], [0], [1], [0, 0, 1, 1], [], []>} : vector<16x16xf32>, vector<16x8xf32>, vector<16x8xf32> -> vector<16x8xf32>
    %61 = vector.broadcast %58 : vector<16x1xf32> to vector<16x8xf32>
    %62 = arith.mulf %60, %61 : vector<16x8xf32>
    %63 = vector.extract_strided_slice %1 {offsets = [0, 24], sizes = [16, 8], strides = [1, 1]} : vector<16x32xf32> to vector<16x8xf32>
    %64 = vector.extract_strided_slice %3 {offsets = [0, 24], sizes = [16, 8], strides = [1, 1]} : vector<16x32xf32> to vector<16x8xf32>
    %cst_22 = arith.constant dense<0.000000e+00> : vector<16x16xf32>
    %65 = tpu.matmul %63, %64, %cst_22 {dimension_numbers = #tpu.dot_dimension_numbers<[1], [1], [0], [0], [0, 0, 1, 0], [], []>} : vector<16x8xf32>, vector<16x8xf32>, vector<16x16xf32> -> vector<16x16xf32>
    %cst_23 = arith.constant dense<0xFF800000> : vector<16xf32>
    %66 = vector.multi_reduction <maximumf>, %65, %cst_23 [1] : vector<16x16xf32> to vector<16xf32>
    %67 = vector.shape_cast %66 : vector<16xf32> to vector<16x1xf32>
    %68 = vector.broadcast %67 : vector<16x1xf32> to vector<16x16xf32>
    %69 = arith.subf %65, %68 : vector<16x16xf32>
    %70 = math.exp2 %69 : vector<16x16xf32>
    %cst_24 = arith.constant dense<0.000000e+00> : vector<16xf32>
    %71 = vector.multi_reduction <add>, %70, %cst_24 [1] : vector<16x16xf32> to vector<16xf32>
    %72 = vector.shape_cast %71 : vector<16xf32> to vector<16x1xf32>
    %73 = tpu.reciprocal %72 {approx = true} : vector<16x1xf32> -> vector<16x1xf32>
    %74 = arith.mulf %72, %73 : vector<16x1xf32>
    %cst_25 = arith.constant 2.000000e+00 : f32
    %75 = vector.broadcast %cst_25 : f32 to vector<16x1xf32>
    %76 = arith.subf %75, %74 : vector<16x1xf32>
    %77 = arith.mulf %73, %76 : vector<16x1xf32>
    %78 = vector.extract_strided_slice %5 {offsets = [0, 24], sizes = [16, 8], strides = [1, 1]} : vector<16x32xf32> to vector<16x8xf32>
    %cst_26 = arith.constant dense<0.000000e+00> : vector<16x8xf32>
    %79 = tpu.matmul %70, %78, %cst_26 {dimension_numbers = #tpu.dot_dimension_numbers<[1], [0], [0], [1], [0, 0, 1, 1], [], []>} : vector<16x16xf32>, vector<16x8xf32>, vector<16x8xf32> -> vector<16x8xf32>
    %80 = vector.broadcast %77 : vector<16x1xf32> to vector<16x8xf32>
    %81 = arith.mulf %79, %80 : vector<16x8xf32>
    %82 = tpu.concatenate %24, %43, %62, %81 in 1 : vector<16x8xf32>, vector<16x8xf32>, vector<16x8xf32>, vector<16x8xf32> -> vector<16x32xf32>
    %c0_27 = arith.constant 0 : index
    %c0_28 = arith.constant 0 : index
    %c0_29 = arith.constant 0 : index
    %83 = vector.load %arg6[%c0_27, %c0_28, %c0_29] : memref<1x16x32xf32, #tpu.memory_space<vmem>>, vector<1x16x32xf32>
    %84 = vector.shape_cast %83 : vector<1x16x32xf32> to vector<16x32xf32>
    %85 = vector.shape_cast %82 : vector<16x32xf32> to vector<1x16x32xf32>
    tpu.vector_store %arg6[%c0_27, %c0_28, %c0_29], %85 {strides = array<i32>} : memref<1x16x32xf32, #tpu.memory_space<vmem>>, vector<1x16x32xf32>,
    return
  }
  func.func @transform_0(%arg0: i32, %arg1: i32, %arg2: i32) -> (i32, i32, i32) {
    %c0_i32 = arith.constant 0 : i32
    return %arg0, %arg2, %arg1 : i32, i32, i32
  }
  func.func @transform_1(%arg0: i32, %arg1: i32, %arg2: i32) -> (i32, i32, i32) {
    %c0_i32 = arith.constant 0 : i32
    %c0_i32_0 = arith.constant 0 : i32
    return %arg0, %c0_i32, %arg1 : i32, i32, i32
  }
  func.func @transform_2(%arg0: i32, %arg1: i32, %arg2: i32) -> (i32, i32, i32) {
    %c0_i32 = arith.constant 0 : i32
    %c0_i32_0 = arith.constant 0 : i32
    return %arg0, %c0_i32, %arg1 : i32, i32, i32
  }
  func.func @transform_3(%arg0: i32, %arg1: i32, %arg2: i32) -> (i32, i32, i32) {
    %c0_i32 = arith.constant 0 : i32
    return %arg0, %arg2, %arg1 : i32, i32, i32
  }
}

</mosaic_0001>

<llo_original>
// kernel: tpu_custom_call.1
$region0: #{tpu_custom_call.1}
  #allocation0 [shape = 'u32[]', space=smem, size = 0x4, offset = 0x4, fixed_abs, tag = 'smem constant byte address 0x4 - core index']
  #allocation1 [shape = 'u32[144,128]{1,0:T(1,128)}', space=vmem, size = 0x12000, scoped, tag = 'internal scratch']
  %s0 = inlined_call_operand.hbm [shape: f32[2,16,32], index: 0, kind: input, shape index: {}]
  %s1 = inlined_call_operand.hbm [shape: f32[2,16,32], index: 1, kind: input, shape index: {}]
  %s2 = inlined_call_operand.hbm [shape: f32[2,16,32], index: 2, kind: input, shape index: {}]
  %s3 = inlined_call_operand.hbm [shape: f32[2,16,32], index: 3, kind: output, shape index: {}]
  %s4 = sld [smem:[#allocation0]]
  $region57: #{tpu_custom_call.1} parent=0
    _
  %s6 = ssub.s32 1, %s4
  %s7 = scalar_select 0, %s6, %s4
  $region1: #{tpu_custom_call.1} parent=0
    #allocation2 [shape = 'u8[16384]{0}', space=vmem, size = 0x4000, scoped, tag = 'input window, operand 0']
    #allocation3 [shape = 's32[2]{0}', space=sflag, size = 0x8, scoped, tag = 'scoped memory for tpu_custom_call.1']
    #allocation4 [shape = 's32[2]{0}', space=sflag, size = 0x8, scoped, tag = 'scoped memory for tpu_custom_call.1']
    #allocation5 [shape = 'u8[16384]{0}', space=vmem, size = 0x4000, scoped, tag = 'input window, operand 1']
    #allocation6 [shape = 's32[2]{0}', space=sflag, size = 0x8, scoped, tag = 'scoped memory for tpu_custom_call.1']
    #allocation7 [shape = 'u8[16384]{0}', space=vmem, size = 0x4000, scoped, tag = 'input window, operand 2']
    #allocation8 [shape = 'u8[16384]{0}', space=vmem, size = 0x4000, scoped, tag = 'output window, operand 0']
    %8 = vsyncpa [#allocation3], 0
    %s9 = scalar_lea.sflag [#allocation3], 1
    %10 = vsyncpa %s9, 0
    %11 = vsyncpa [#allocation6], 0
    %s12 = scalar_lea.sflag [#allocation6], 1
    %13 = vsyncpa %s12, 0
    %14 = vsyncpa [#allocation4], 0
    %s15 = scalar_lea.sflag [#allocation4], 1
    %16 = vsyncpa %s15, 0
    loop: start=0, step=1, limit=4
    $region2: #{tpu_custom_call.1} parent=1 // loop_pre_header
      _
    $region3: #{tpu_custom_call.1} parent=1 // loop_header
      %s18 = sphi 0, %s22
      %p19 = scmp.ge.s32.totalorder %s18, 4
      %s25 = sphi 0, %s44
      %s26 = sphi 0, %s40
      %s27 = sphi 0, %s36
      %s28 = sphi 0, %s25
      %s29 = sphi 0, %s26
      %s30 = sphi 0, %s27
      %s31 = sphi 0, %s28
      %s32 = sphi 0, %s29
      %s33 = sphi 0, %s30
      %s51 = sphi 0, %s53
      %s54 = sphi 0, %s51
      %s55 = sphi 0, %s54
      %s71 = sphi 0, %s55
      %s79 = sphi 0, %s81
      %s82 = sphi 0, %s79
      %s83 = sphi 0, %s82
      %s99 = sphi 0, %s83
      %s107 = sphi 0, %s109
      %s110 = sphi 0, %s107
      %s111 = sphi 0, %s110
      %s127 = sphi 0, %s111
      %s137 = sphi 0, %s139
      %s140 = sphi 0, %s137
      %s141 = sphi 0, %s140
      %s157 = sphi 0, %s141
    $region4: #{tpu_custom_call.1} parent=1 // loop_header_branch
      %21 = sbr.rel (%p19) target = $region8
    $region5: #{tpu_custom_call.1} parent=1 // loop_body
      %s23 = ssub.s32 %s18, 1
      %s24 = ssub.s32 %s18, 2
      %s34 = sadd.s32 1, %s27
      %p35 = scmp.ge.s32.totalorder %s34, 1
      %s36 = scalar_select %p35, 0, %s34
      %s37 = sadd.s32 1, %s26
      %s38 = scalar_select %p35, %s37, %s26
      %p39 = scmp.ge.s32.totalorder %s38, 1
      %s40 = scalar_select %p39, 0, %s38
      %s41 = sadd.s32 1, %s25
      %s42 = scalar_select %p39, %s41, %s25
      %p43 = scmp.ge.s32.totalorder %s42, 2
      %s44 = scalar_select %p43, 0, %s42
      %s45 = ssub.s32 %s25, %s44
      %s46 = ssub.s32 %s27, %s36
      %s47 = sor.u32 %s45, %s46
      %s48 = ssub.s32 %s26, %s40
      %s49 = sor.u32 %s47, %s48
      %p50 = scmp.eq.s32.totalorder %s49, 0
      %s52 = sadd.s32 %s51, 1
      %s53 = scalar_select %p50, %s51, %s52
      %p56 = pneg %p50
      %p57 = scmp.eq.s32.totalorder %s18, 1
      %p58 = por %p56, %p57
      %p59 = scmp.ne.s32.totalorder %s51, %s54
      %p60 = scmp.eq.s32.totalorder %s18, 0
      %p61 = por %p59, %p60
      %p62 = scmp.ne.s32.totalorder %s51, %s54
      %p63 = scmp.eq.s32.totalorder %s23, 1
      %p64 = por %p62, %p63
      %p65 = scmp.ne.s32.totalorder %s54, %s55
      %p66 = scmp.eq.s32.totalorder %s23, 0
      %p67 = por %p65, %p66
      %p68 = scmp.ne.s32.totalorder %s54, %s55
      %p69 = scmp.eq.s32.totalorder %s24, 1
      %p70 = por %p68, %p69
      %p72 = scmp.ne.s32.totalorder %s55, %s71
      %p73 = scmp.eq.s32.totalorder %s24, 0
      %p74 = por %p72, %p73
      %s75 = ssub.s32 %s25, %s44
      %s76 = ssub.s32 %s26, %s40
      %s77 = sor.u32 %s75, %s76
      %p78 = scmp.eq.s32.totalorder %s77, 0
      %s80 = sadd.s32 %s79, 1
      %s81 = scalar_select %p78, %s79, %s80
      %p84 = pneg %p78
      %p85 = scmp.eq.s32.totalorder %s18, 1
      %p86 = por %p84, %p85
      %p87 = scmp.ne.s32.totalorder %s79, %s82
      %p88 = scmp.eq.s32.totalorder %s18, 0
      %p89 = por %p87, %p88
      %p90 = scmp.ne.s32.totalorder %s79, %s82
      %p91 = scmp.eq.s32.totalorder %s23, 1
      %p92 = por %p90, %p91
      %p93 = scmp.ne.s32.totalorder %s82, %s83
      %p94 = scmp.eq.s32.totalorder %s23, 0
      %p95 = por %p93, %p94
      %p96 = scmp.ne.s32.totalorder %s82, %s83
      %p97 = scmp.eq.s32.totalorder %s24, 1
      %p98 = por %p96, %p97
      %p100 = scmp.ne.s32.totalorder %s83, %s99
      %p101 = scmp.eq.s32.totalorder %s24, 0
      %p102 = por %p100, %p101
      %s103 = ssub.s32 %s25, %s44
      %s104 = ssub.s32 %s26, %s40
      %s105 = sor.u32 %s103, %s104
      %p106 = scmp.eq.s32.totalorder %s105, 0
      %s108 = sadd.s32 %s107, 1
      %s109 = scalar_select %p106, %s107, %s108
      %p112 = pneg %p106
      %p113 = scmp.eq.s32.totalorder %s18, 1
      %p114 = por %p112, %p113
      %p115 = scmp.ne.s32.totalorder %s107, %s110
      %p116 = scmp.eq.s32.totalorder %s18, 0
      %p117 = por %p115, %p116
      %p118 = scmp.ne.s32.totalorder %s107, %s110
      %p119 = scmp.eq.s32.totalorder %s23, 1
      %p120 = por %p118, %p119
      %p121 = scmp.ne.s32.totalorder %s110, %s111
      %p122 = scmp.eq.s32.totalorder %s23, 0
      %p123 = por %p121, %p122
      %p124 = scmp.ne.s32.totalorder %s110, %s111
      %p125 = scmp.eq.s32.totalorder %s24, 1
      %p126 = por %p124, %p125
      %p128 = scmp.ne.s32.totalorder %s111, %s127
      %p129 = scmp.eq.s32.totalorder %s24, 0
      %p130 = por %p128, %p129
      %s131 = ssub.s32 %s25, %s44
      %s132 = ssub.s32 %s27, %s36
      %s133 = sor.u32 %s131, %s132
      %s134 = ssub.s32 %s26, %s40
      %s135 = sor.u32 %s133, %s134
      %p136 = scmp.eq.s32.totalorder %s135, 0
      %s138 = sadd.s32 %s137, 1
      %s139 = scalar_select %p136, %s137, %s138
      %p142 = pneg %p136
      %p143 = scmp.eq.s32.totalorder %s18, 1
      %p144 = por %p142, %p143
      %p145 = scmp.ne.s32.totalorder %s137, %s140
      %p146 = scmp.eq.s32.totalorder %s18, 0
      %p147 = por %p145, %p146
      %p148 = scmp.ne.s32.totalorder %s137, %s140
      %p149 = scmp.eq.s32.totalorder %s23, 1
      %p150 = por %p148, %p149
      %p151 = scmp.ne.s32.totalorder %s140, %s141
      %p152 = scmp.eq.s32.totalorder %s23, 0
      %p153 = por %p151, %p152
      %p154 = scmp.ne.s32.totalorder %s140, %s141
      %p155 = scmp.eq.s32.totalorder %s24, 1
      %p156 = por %p154, %p155
      %p158 = scmp.ne.s32.totalorder %s141, %s157
      %p159 = scmp.eq.s32.totalorder %s24, 0
      %p160 = por %p158, %p159
      %p161 = scmp.le.s32.totalorder 1, %s18
      %p162 = scmp.lt.s32.totalorder %s18, 3
      %p163 = pnand %p161, %p162
      %p164 = pneg %p163
      // Predicated region
      $region9: #{tpu_custom_call.1} parent=5 // pred_check
        _
      $region10: #{tpu_custom_call.1} parent=5 // pred_check_branch
        %166 = sbr.rel (%p163) target = $region12
      $region11: #{tpu_custom_call.1} parent=5 // pred_region
        %s167 = ssub.s32 %s18, 1
      $region12: #{tpu_custom_call.1} parent=5 // pred_fallthru
        _
      %p168 = scmp.lt.s32.totalorder %s18, 2
      // Predicated region
      $region13: #{tpu_custom_call.1} parent=5 // pred_check
        %p169 = pneg %p168
      $region14: #{tpu_custom_call.1} parent=5 // pred_check_branch
        %171 = sbr.rel (%p169) target = $region16
      $region15: #{tpu_custom_call.1} parent=5 // pred_region
        // Predicated region
        $region17: #{tpu_custom_call.1} parent=15 // pred_check
          %p172 = pneg %p61
        $region18: #{tpu_custom_call.1} parent=15 // pred_check_branch
          %174 = sbr.rel (%p172) target = $region20
        $region19: #{tpu_custom_call.1} parent=15 // pred_region
          %s175 = sand.u32 %s51, 1
          %s176 = scalar_lea.sflag [#allocation3], %s175
          %s177 = sand.u32 %s51, 1
          %s178 = smul.addr %s177, 16
          %s179 = scalar_lea.vmem [#allocation2], %s178
          %s180 = smul.u32 2, %s27
          %s182 = ssub.s32 256, 256
          %183 = vsyncadd %s176, %s182
          %s184 = sadd.s32 %s26, %s180
          %s185 = smul.addr %s25, 2
          %s186 = sadd.s32 %s184, %s185
          %s187 = smul.addr %s186, 128
          %s188 = scalar_lea.hbm %s0, %s187
          %s189 = sshll.u32 %s179, 4
          %s190 = int_to_ptr.vmem [resolvable:$true] %s189
          %195 = dma.hbm_to_vmem [thread:$0]  %s188, 256, %s190, %s176, 128, 128, 8
        $region20: #{tpu_custom_call.1} parent=15 // pred_fallthru
          _
        // Predicated region
        $region21: #{tpu_custom_call.1} parent=15 // pred_check
          %p196 = pneg %p89
        $region22: #{tpu_custom_call.1} parent=15 // pred_check_branch
          %198 = sbr.rel (%p196) target = $region24
        $region23: #{tpu_custom_call.1} parent=15 // pred_region
          %s199 = sand.u32 %s18, 1
          %s200 = scalar_lea.sflag [#allocation6], %s199
          %s201 = sand.u32 %s79, 1
          %s202 = smul.addr %s201, 16
          %s203 = scalar_lea.vmem [#allocation5], %s202
          %s205 = ssub.s32 256, 256
          %206 = vsyncadd %s200, %s205
          %s207 = smul.addr %s25, 2
          %s208 = sadd.s32 %s26, %s207
          %s209 = smul.addr %s208, 128
          %s210 = scalar_lea.hbm %s1, %s209
          %s211 = sshll.u32 %s203, 4
          %s212 = int_to_ptr.vmem [resolvable:$true] %s211
          %217 = dma.hbm_to_vmem [thread:$0]  %s210, 256, %s212, %s200, 128, 128, 8
        $region24: #{tpu_custom_call.1} parent=15 // pred_fallthru
          _
        // Predicated region
        $region25: #{tpu_custom_call.1} parent=15 // pred_check
          %p218 = pneg %p117
        $region26: #{tpu_custom_call.1} parent=15 // pred_check_branch
          %220 = sbr.rel (%p218) target = $region28
        $region27: #{tpu_custom_call.1} parent=15 // pred_region
          %s221 = sand.u32 %s18, 1
          %s222 = scalar_lea.sflag [#allocation6], %s221
          %s223 = sand.u32 %s107, 1
          %s224 = smul.addr %s223, 16
          %s225 = scalar_lea.vmem [#allocation7], %s224
          %s227 = ssub.s32 256, 256
          %228 = vsyncadd %s222, %s227
          %s229 = smul.addr %s25, 2
          %s230 = sadd.s32 %s26, %s229
          %s231 = smul.addr %s230, 128
          %s232 = scalar_lea.hbm %s2, %s231
          %s233 = sshll.u32 %s225, 4
          %s234 = int_to_ptr.vmem [resolvable:$true] %s233
          %239 = dma.hbm_to_vmem [thread:$0]  %s232, 256, %s234, %s222, 128, 128, 8
        $region28: #{tpu_custom_call.1} parent=15 // pred_fallthru
          _
      $region16: #{tpu_custom_call.1} parent=5 // pred_fallthru
        _
      %p240 = scmp.le.s32.totalorder 1, %s18
      %p241 = scmp.lt.s32.totalorder %s18, 3
      %p242 = pnand %p240, %p241
      %p243 = pneg %p242
      // Predicated region
      $region29: #{tpu_custom_call.1} parent=5 // pred_check
        _
      $region30: #{tpu_custom_call.1} parent=5 // pred_check_branch
        %245 = sbr.rel (%p242) target = $region32
      $region31: #{tpu_custom_call.1} parent=5 // pred_region
        %s246 = ssub.s32 %s18, 1
        %s247 = sand.u32 %s54, 1
        %s248 = scalar_lea.sflag [#allocation3], %s247
        %s249 = sand.u32 %s54, 1
        %s250 = smul.addr %s249, 16
        %s251 = scalar_lea.vmem [#allocation2], %s250
        // Predicated region
        $region33: #{tpu_custom_call.1} parent=31 // pred_check
          %p252 = pneg %p67
        $region34: #{tpu_custom_call.1} parent=31 // pred_check_branch
          %254 = sbr.rel (%p252) target = $region36
        $region35: #{tpu_custom_call.1} parent=31 // pred_region
          %255 = dma.done %s248, 256
        $region36: #{tpu_custom_call.1} parent=31 // pred_fallthru
          _
        %s256 = sand.u32 %s23, 1
        %s257 = scalar_lea.sflag [#allocation6], %s256
        %s258 = sand.u32 %s82, 1
        %s259 = smul.addr %s258, 16
        %s260 = scalar_lea.vmem [#allocation5], %s259
        // Predicated region
        $region37: #{tpu_custom_call.1} parent=31 // pred_check
          %p261 = pneg %p95
        $region38: #{tpu_custom_call.1} parent=31 // pred_check_branch
          %263 = sbr.rel (%p261) target = $region40
        $region39: #{tpu_custom_call.1} parent=31 // pred_region
          %264 = dma.done %s257, 256
        $region40: #{tpu_custom_call.1} parent=31 // pred_fallthru
          _
        %s265 = sand.u32 %s23, 1
        %s266 = scalar_lea.sflag [#allocation6], %s265
        %s267 = sand.u32 %s110, 1
        %s268 = smul.addr %s267, 16
        %s269 = scalar_lea.vmem [#allocation7], %s268
        // Predicated region
        $region41: #{tpu_custom_call.1} parent=31 // pred_check
          %p270 = pneg %p123
        $region42: #{tpu_custom_call.1} parent=31 // pred_check_branch
          %272 = sbr.rel (%p270) target = $region44
        $region43: #{tpu_custom_call.1} parent=31 // pred_region
          %273 = dma.done %s266, 256
        $region44: #{tpu_custom_call.1} parent=31 // pred_fallthru
          _
        %s274 = sand.u32 %s54, 1
        %s275 = scalar_lea.sflag [#allocation3], %s274
        %s276 = sand.u32 %s54, 1
        %s277 = smul.addr %s276, 16
        %s278 = scalar_lea.vmem [#allocation2], %s277
        %p279 = pneg %p67
        %p280 = pneg %p64
        %s281 = sand.u32 %s23, 1
        %s282 = scalar_lea.sflag [#allocation6], %s281
        %s283 = sand.u32 %s82, 1
        %s284 = smul.addr %s283, 16
        %s285 = scalar_lea.vmem [#allocation5], %s284
        %p286 = pneg %p95
        %p287 = pneg %p92
        %s288 = sand.u32 %s23, 1
        %s289 = scalar_lea.sflag [#allocation6], %s288
        %s290 = sand.u32 %s110, 1
        %s291 = smul.addr %s290, 16
        %s292 = scalar_lea.vmem [#allocation7], %s291
        %p293 = pneg %p123
        %p294 = pneg %p120
        %p295 = pneg %p153
        %p296 = pneg %p150
        %s297 = sand.u32 %s140, 1
        %s298 = scalar_lea.sflag [#allocation4], %s297
        %s299 = sand.u32 %s140, 1
        %s300 = smul.addr %s299, 16
        %s301 = scalar_lea.vmem [#allocation8], %s300
        %s302 = smul.u32 2, %s30
        %s303 = smul.u32 2, %s30
        %v304 = vld [vmem:[%s251] sm:$0xff]
        %v305 = vld [vmem:[%s251 + $0x8] sm:$0xff]
        %v306 = vld [vmem:[%s260] sm:$0xff]
        %v307 = vld [vmem:[%s260 + $0x8] sm:$0xff]
        %v308 = vld [vmem:[%s269] sm:$0xff]
        %v309 = vld [vmem:[%s269 + $0x8] sm:$0xff]
        %vm310 = vcmask 64512
        %v312 = vsel %vm310, %v304, 0
        %v315 = vsel %vm310, %v305, 0
        %v318 = vsel %vm310, %v306, 0
        %v321 = vsel %vm310, %v307, 0
        %323 = vmatprep.subr.mxu0 0.0
        %324 = vmatpush1.xpose.msra.mxu0 %v318
        %325 = vmatprep.subr.mxu0 0.0
        %326 = vmatpush1.xpose.msra.mxu0 %v321
        %327 = vmatprep.subr.mxu0 0.0
        %328 = vmatpush1.xpose.msra.mxu0 0.0
        %329 = vmatprep.subr.mxu0 0.0
        %330 = vmatpush1.xpose.msra.mxu0 0.0
        %331 = vmatprep.subr.mxu0 0.0
        %332 = vmatpush1.xpose.msra.mxu0 0.0
        %333 = vmatprep.subr.mxu0 0.0
        %334 = vmatpush1.xpose.msra.mxu0 0.0
        %335 = vmatprep.subr.mxu0 0.0
        %336 = vmatpush1.xpose.msra.mxu0 0.0
        %337 = vmatprep.subr.mxu0 0.0
        %338 = vmatpush1.xpose.msra.mxu0 0.0
        %339 = vmatprep.subr.mxu0 0.0
        %340 = vmatpush1.xpose.msra.mxu0 0.0
        %341 = vmatprep.subr.mxu0 0.0
        %342 = vmatpush1.xpose.msra.mxu0 0.0
        %343 = vmatprep.subr.mxu0 0.0
        %344 = vmatpush1.xpose.msra.mxu0 0.0
        %345 = vmatprep.subr.mxu0 0.0
        %346 = vmatpush1.xpose.msra.mxu0 0.0
        %347 = vmatprep.subr.mxu0 0.0
        %348 = vmatpush1.xpose.msra.mxu0 0.0
        %349 = vmatprep.subr.mxu0 0.0
        %350 = vmatpush1.xpose.msra.mxu0 0.0
        %351 = vmatprep.subr.mxu0 0.0
        %352 = vmatpush1.xpose.msra.mxu0 0.0
        %353 = vmatprep.subr.mxu0 0.0
        %354 = vmatpush1.xpose.msra.mxu0 0.0
        %355 = vmatprep.subr.mxu0 0.0
        %356 = vmatpush1.xpose.msra.mxu0 0.0
        %357 = vmatprep.subr.mxu0 0.0
        %358 = vmatpush1.xpose.msra.mxu0 0.0
        %359 = vmatprep.subr.mxu0 0.0
        %360 = vmatpush1.xpose.msra.mxu0 0.0
        %361 = vmatprep.subr.mxu0 0.0
        %362 = vmatpush1.xpose.msra.mxu0 0.0
        %363 = vmatprep.subr.mxu0 0.0
        %364 = vmatpush1.xpose.msra.mxu0 0.0
        %365 = vmatprep.subr.mxu0 0.0
        %366 = vmatpush1.xpose.msra.mxu0 0.0
        %367 = vmatprep.subr.mxu0 0.0
        %368 = vmatpush1.xpose.msra.mxu0 0.0
        %369 = vmatprep.subr.mxu0 0.0
        %370 = vmatpush1.xpose.msra.mxu0 0.0
        %371 = vmatprep.subr.mxu0 0.0
        %372 = vmatpush1.xpose.msra.mxu0 0.0
        %373 = vmatprep.subr.mxu0 0.0
        %374 = vmatpush1.xpose.msra.mxu0 0.0
        %375 = vmatprep.subr.mxu0 0.0
        %376 = vmatpush1.xpose.msra.mxu0 0.0
        %377 = vmatprep.subr.mxu0 0.0
        %378 = vmatpush1.xpose.msra.mxu0 0.0
        %379 = vmatprep.subr.mxu0 0.0
        %380 = vmatpush1.xpose.msra.mxu0 0.0
        %381 = vmatprep.subr.mxu0 0.0
        %382 = vmatpush1.xpose.msra.mxu0 0.0
        %383 = vmatprep.subr.mxu0 0.0
        %384 = vmatpush1.xpose.msra.mxu0 0.0
        %385 = vmatprep.subr.mxu0 0.0
        %386 = vmatpush1.xpose.msra.mxu0 0.0
        %387 = vmatprep.mubr.f32.mxu0 0.0
        %388 = vmatmul.mubr.f32.gmra.mrb[0].mxu0 %v312
        %v389 = vpop.f32.mrb[0].mxu0
        %v390 = vadd.f32 0.0, %v389
        %v391 = vpop.f32.mrb[0].mxu0
        %392 = vmatprep.mubr.f32.mxu0 0.0
        %393 = vmatmul.mubr.f32.gmra.mrb[0].mxu0 %v315
        %v394 = vpop.f32.mrb[0].mxu0
        %v395 = vadd.f32 0.0, %v394
        %v396 = vpop.f32.mrb[0].mxu0
        %397 = vdwg.mxu0
        %vm398 = vcmask 130048
        %v399 = vsel %vm398, %v390, -inf
        %400 = vmax.xlane.f32.xlu0 %v399
        %v401 = vpop.xlane.xlu0 %400
        %v402 = vsel %vm398, %v395, -inf
        %403 = vmax.xlane.f32.xlu0 %v402
        %v404 = vpop.xlane.xlu0 %403
        %v405 = vsub.f32 %v390, %v401
        %v406 = vsub.f32 %v395, %v404
        %v407 = vpow.pop %v405
        %v408 = vpow.pop %v406
        %v409 = vsel %vm398, %v407, 0.0
        %410 = vadd.xlane.f32.xlu0 %v409
        %v411 = vpop.xlane.xlu0 %410
        %v412 = vsel %vm398, %v408, 0.0
        %413 = vadd.xlane.f32.xlu0 %v412
        %v414 = vpop.xlane.xlu0 %413
        %v415 = vrcp.pop %v411
        %v416 = vrcp.pop %v414
        %v417 = vmul.f32 %v411, %v415
        %v418 = vmul.f32 %v414, %v416
        %v419 = vsub.f32 2.0, %v417
        %v420 = vsub.f32 2.0, %v418
        %v421 = vmul.f32 %v415, %v419
        %v422 = vmul.f32 %v416, %v420
        %v424 = vsel %vm398, %v407, 0
        %v427 = vsel %vm398, %v408, 0
        %429 = vmatprep.subr.mxu0 0.0
        %430 = vmatpush1.msra.mxu0 %v308
        %431 = vmatprep.subr.mxu0 0.0
        %432 = vmatpush1.msra.mxu0 %v309
        %433 = vmatprep.subr.mxu0 0.0
        %434 = vmatpush1.msra.mxu0 0.0
        %435 = vmatprep.subr.mxu0 0.0
        %436 = vmatpush1.msra.mxu0 0.0
        %437 = vmatprep.subr.mxu0 0.0
        %438 = vmatpush1.msra.mxu0 0.0
        %439 = vmatprep.subr.mxu0 0.0
        %440 = vmatpush1.msra.mxu0 0.0
        %441 = vmatprep.subr.mxu0 0.0
        %442 = vmatpush1.msra.mxu0 0.0
        %443 = vmatprep.subr.mxu0 0.0
        %444 = vmatpush1.msra.mxu0 0.0
        %445 = vmatprep.subr.mxu0 0.0
        %446 = vmatpush1.msra.mxu0 0.0
        %447 = vmatprep.subr.mxu0 0.0
        %448 = vmatpush1.msra.mxu0 0.0
        %449 = vmatprep.subr.mxu0 0.0
        %450 = vmatpush1.msra.mxu0 0.0
        %451 = vmatprep.subr.mxu0 0.0
        %452 = vmatpush1.msra.mxu0 0.0
        %453 = vmatprep.subr.mxu0 0.0
        %454 = vmatpush1.msra.mxu0 0.0
        %455 = vmatprep.subr.mxu0 0.0
        %456 = vmatpush1.msra.mxu0 0.0
        %457 = vmatprep.subr.mxu0 0.0
        %458 = vmatpush1.msra.mxu0 0.0
        %459 = vmatprep.subr.mxu0 0.0
        %460 = vmatpush1.msra.mxu0 0.0
        %461 = vmatprep.subr.mxu0 0.0
        %462 = vmatpush1.msra.mxu0 0.0
        %463 = vmatprep.subr.mxu0 0.0
        %464 = vmatpush1.msra.mxu0 0.0
        %465 = vmatprep.subr.mxu0 0.0
        %466 = vmatpush1.msra.mxu0 0.0
        %467 = vmatprep.subr.mxu0 0.0
        %468 = vmatpush1.msra.mxu0 0.0
        %469 = vmatprep.subr.mxu0 0.0
        %470 = vmatpush1.msra.mxu0 0.0
        %471 = vmatprep.subr.mxu0 0.0
        %472 = vmatpush1.msra.mxu0 0.0
        %473 = vmatprep.subr.mxu0 0.0
        %474 = vmatpush1.msra.mxu0 0.0
        %475 = vmatprep.subr.mxu0 0.0
        %476 = vmatpush1.msra.mxu0 0.0
        %477 = vmatprep.subr.mxu0 0.0
        %478 = vmatpush1.msra.mxu0 0.0
        %479 = vmatprep.subr.mxu0 0.0
        %480 = vmatpush1.msra.mxu0 0.0
        %481 = vmatprep.subr.mxu0 0.0
        %482 = vmatpush1.msra.mxu0 0.0
        %483 = vmatprep.subr.mxu0 0.0
        %484 = vmatpush1.msra.mxu0 0.0
        %485 = vmatprep.subr.mxu0 0.0
        %486 = vmatpush1.msra.mxu0 0.0
        %487 = vmatprep.subr.mxu0 0.0
        %488 = vmatpush1.msra.mxu0 0.0
        %489 = vmatprep.subr.mxu0 0.0
        %490 = vmatpush1.msra.mxu0 0.0
        %491 = vmatprep.subr.mxu0 0.0
        %492 = vmatpush1.msra.mxu0 0.0
        %493 = vmatprep.mubr.f32.mxu0 0.0
        %494 = vmatmul.mubr.f32.gmra.mrb[0].mxu0 %v424
        %v495 = vpop.f32.mrb[0].mxu0
        %v496 = vadd.f32 0.0, %v495
        %v497 = vpop.f32.mrb[0].mxu0
        %498 = vmatprep.mubr.f32.mxu0 0.0
        %499 = vmatmul.mubr.f32.gmra.mrb[0].mxu0 %v427
        %v500 = vpop.f32.mrb[0].mxu0
        %v501 = vadd.f32 0.0, %v500
        %v502 = vpop.f32.mrb[0].mxu0
        %503 = vdwg.mxu0
        %v504 = vmul.f32 %v496, %v421
        %v505 = vmul.f32 %v501, %v422
        %506 = vrot.lane.b32.xlu0 %v304, 120
        %v507 = vpop.permute.xlu0 %506
        %508 = vrot.lane.b32.xlu0 %v305, 120
        %v509 = vpop.permute.xlu0 %508
        %510 = vrot.lane.b32.xlu0 %v306, 120
        %v511 = vpop.permute.xlu0 %510
        %512 = vrot.lane.b32.xlu0 %v307, 120
        %v513 = vpop.permute.xlu0 %512
        %v514 = vsel %vm310, %v507, 0
        %v516 = vsel %vm310, %v509, 0
        %v518 = vsel %vm310, %v511, 0
        %v520 = vsel %vm310, %v513, 0
        %522 = vmatprep.subr.mxu0 0.0
        %523 = vmatpush1.xpose.msra.mxu0 %v518
        %524 = vmatprep.subr.mxu0 0.0
        %525 = vmatpush1.xpose.msra.mxu0 %v520
        %526 = vmatprep.subr.mxu0 0.0
        %527 = vmatpush1.xpose.msra.mxu0 0.0
        %528 = vmatprep.subr.mxu0 0.0
        %529 = vmatpush1.xpose.msra.mxu0 0.0
        %530 = vmatprep.subr.mxu0 0.0
        %531 = vmatpush1.xpose.msra.mxu0 0.0
        %532 = vmatprep.subr.mxu0 0.0
        %533 = vmatpush1.xpose.msra.mxu0 0.0
        %534 = vmatprep.subr.mxu0 0.0
        %535 = vmatpush1.xpose.msra.mxu0 0.0
        %536 = vmatprep.subr.mxu0 0.0
        %537 = vmatpush1.xpose.msra.mxu0 0.0
        %538 = vmatprep.subr.mxu0 0.0
        %539 = vmatpush1.xpose.msra.mxu0 0.0
        %540 = vmatprep.subr.mxu0 0.0
        %541 = vmatpush1.xpose.msra.mxu0 0.0
        %542 = vmatprep.subr.mxu0 0.0
        %543 = vmatpush1.xpose.msra.mxu0 0.0
        %544 = vmatprep.subr.mxu0 0.0
        %545 = vmatpush1.xpose.msra.mxu0 0.0
        %546 = vmatprep.subr.mxu0 0.0
        %547 = vmatpush1.xpose.msra.mxu0 0.0
        %548 = vmatprep.subr.mxu0 0.0
        %549 = vmatpush1.xpose.msra.mxu0 0.0
        %550 = vmatprep.subr.mxu0 0.0
        %551 = vmatpush1.xpose.msra.mxu0 0.0
        %552 = vmatprep.subr.mxu0 0.0
        %553 = vmatpush1.xpose.msra.mxu0 0.0
        %554 = vmatprep.subr.mxu0 0.0
        %555 = vmatpush1.xpose.msra.mxu0 0.0
        %556 = vmatprep.subr.mxu0 0.0
        %557 = vmatpush1.xpose.msra.mxu0 0.0
        %558 = vmatprep.subr.mxu0 0.0
        %559 = vmatpush1.xpose.msra.mxu0 0.0
        %560 = vmatprep.subr.mxu0 0.0
        %561 = vmatpush1.xpose.msra.mxu0 0.0
        %562 = vmatprep.subr.mxu0 0.0
        %563 = vmatpush1.xpose.msra.mxu0 0.0
        %564 = vmatprep.subr.mxu0 0.0
        %565 = vmatpush1.xpose.msra.mxu0 0.0
        %566 = vmatprep.subr.mxu0 0.0
        %567 = vmatpush1.xpose.msra.mxu0 0.0
        %568 = vmatprep.subr.mxu0 0.0
        %569 = vmatpush1.xpose.msra.mxu0 0.0
        %570 = vmatprep.subr.mxu0 0.0
        %571 = vmatpush1.xpose.msra.mxu0 0.0
        %572 = vmatprep.subr.mxu0 0.0
        %573 = vmatpush1.xpose.msra.mxu0 0.0
        %574 = vmatprep.subr.mxu0 0.0
        %575 = vmatpush1.xpose.msra.mxu0 0.0
        %576 = vmatprep.subr.mxu0 0.0
        %577 = vmatpush1.xpose.msra.mxu0 0.0
        %578 = vmatprep.subr.mxu0 0.0
        %579 = vmatpush1.xpose.msra.mxu0 0.0
        %580 = vmatprep.subr.mxu0 0.0
        %581 = vmatpush1.xpose.msra.mxu0 0.0
        %582 = vmatprep.subr.mxu0 0.0
        %583 = vmatpush1.xpose.msra.mxu0 0.0
        %584 = vmatprep.subr.mxu0 0.0
        %585 = vmatpush1.xpose.msra.mxu0 0.0
        %586 = vmatprep.mubr.f32.mxu0 0.0
        %587 = vmatmul.mubr.f32.gmra.mrb[0].mxu0 %v514
        %v588 = vpop.f32.mrb[0].mxu0
        %v589 = vadd.f32 0.0, %v588
        %v590 = vpop.f32.mrb[0].mxu0
        %591 = vmatprep.mubr.f32.mxu0 0.0
        %592 = vmatmul.mubr.f32.gmra.mrb[0].mxu0 %v516
        %v593 = vpop.f32.mrb[0].mxu0
        %v594 = vadd.f32 0.0, %v593
        %v595 = vpop.f32.mrb[0].mxu0
        %596 = vdwg.mxu0
        %v597 = vsel %vm398, %v589, -inf
        %598 = vmax.xlane.f32.xlu0 %v597
        %v599 = vpop.xlane.xlu0 %598
        %v600 = vsel %vm398, %v594, -inf
        %601 = vmax.xlane.f32.xlu0 %v600
        %v602 = vpop.xlane.xlu0 %601
        %v603 = vsub.f32 %v589, %v599
        %v604 = vsub.f32 %v594, %v602
        %v605 = vpow.pop %v603
        %v606 = vpow.pop %v604
        %v607 = vsel %vm398, %v605, 0.0
        %608 = vadd.xlane.f32.xlu0 %v607
        %v609 = vpop.xlane.xlu0 %608
        %v610 = vsel %vm398, %v606, 0.0
        %611 = vadd.xlane.f32.xlu0 %v610
        %v612 = vpop.xlane.xlu0 %611
        %v613 = vrcp.pop %v609
        %v614 = vrcp.pop %v612
        %v615 = vmul.f32 %v609, %v613
        %v616 = vmul.f32 %v612, %v614
        %v617 = vsub.f32 2.0, %v615
        %v618 = vsub.f32 2.0, %v616
        %v619 = vmul.f32 %v613, %v617
        %v620 = vmul.f32 %v614, %v618
        %623 = vrot.lane.b32.xlu0 %v308, 120
        %v624 = vpop.permute.xlu0 %623
        %625 = vrot.lane.b32.xlu0 %v309, 120
        %v626 = vpop.permute.xlu0 %625
        %v630 = vsel %vm398, %v605, 0
        %v633 = vsel %vm398, %v606, 0
        %635 = vmatprep.subr.mxu0 0.0
        %636 = vmatpush1.msra.mxu0 %v624
        %637 = vmatprep.subr.mxu0 0.0
        %638 = vmatpush1.msra.mxu0 %v626
        %639 = vmatprep.subr.mxu0 0.0
        %640 = vmatpush1.msra.mxu0 0.0
        %641 = vmatprep.subr.mxu0 0.0
        %642 = vmatpush1.msra.mxu0 0.0
        %643 = vmatprep.subr.mxu0 0.0
        %644 = vmatpush1.msra.mxu0 0.0
        %645 = vmatprep.subr.mxu0 0.0
        %646 = vmatpush1.msra.mxu0 0.0
        %647 = vmatprep.subr.mxu0 0.0
        %648 = vmatpush1.msra.mxu0 0.0
        %649 = vmatprep.subr.mxu0 0.0
        %650 = vmatpush1.msra.mxu0 0.0
        %651 = vmatprep.subr.mxu0 0.0
        %652 = vmatpush1.msra.mxu0 0.0
        %653 = vmatprep.subr.mxu0 0.0
        %654 = vmatpush1.msra.mxu0 0.0
        %655 = vmatprep.subr.mxu0 0.0
        %656 = vmatpush1.msra.mxu0 0.0
        %657 = vmatprep.subr.mxu0 0.0
        %658 = vmatpush1.msra.mxu0 0.0
        %659 = vmatprep.subr.mxu0 0.0
        %660 = vmatpush1.msra.mxu0 0.0
        %661 = vmatprep.subr.mxu0 0.0
        %662 = vmatpush1.msra.mxu0 0.0
        %663 = vmatprep.subr.mxu0 0.0
        %664 = vmatpush1.msra.mxu0 0.0
        %665 = vmatprep.subr.mxu0 0.0
        %666 = vmatpush1.msra.mxu0 0.0
        %667 = vmatprep.subr.mxu0 0.0
        %668 = vmatpush1.msra.mxu0 0.0
        %669 = vmatprep.subr.mxu0 0.0
        %670 = vmatpush1.msra.mxu0 0.0
        %671 = vmatprep.subr.mxu0 0.0
        %672 = vmatpush1.msra.mxu0 0.0
        %673 = vmatprep.subr.mxu0 0.0
        %674 = vmatpush1.msra.mxu0 0.0
        %675 = vmatprep.subr.mxu0 0.0
        %676 = vmatpush1.msra.mxu0 0.0
        %677 = vmatprep.subr.mxu0 0.0
        %678 = vmatpush1.msra.mxu0 0.0
        %679 = vmatprep.subr.mxu0 0.0
        %680 = vmatpush1.msra.mxu0 0.0
        %681 = vmatprep.subr.mxu0 0.0
        %682 = vmatpush1.msra.mxu0 0.0
        %683 = vmatprep.subr.mxu0 0.0
        %684 = vmatpush1.msra.mxu0 0.0
        %685 = vmatprep.subr.mxu0 0.0
        %686 = vmatpush1.msra.mxu0 0.0
        %687 = vmatprep.subr.mxu0 0.0
        %688 = vmatpush1.msra.mxu0 0.0
        %689 = vmatprep.subr.mxu0 0.0
        %690 = vmatpush1.msra.mxu0 0.0
        %691 = vmatprep.subr.mxu0 0.0
        %692 = vmatpush1.msra.mxu0 0.0
        %693 = vmatprep.subr.mxu0 0.0
        %694 = vmatpush1.msra.mxu0 0.0
        %695 = vmatprep.subr.mxu0 0.0
        %696 = vmatpush1.msra.mxu0 0.0
        %697 = vmatprep.subr.mxu0 0.0
        %698 = vmatpush1.msra.mxu0 0.0
        %699 = vmatprep.mubr.f32.mxu0 0.0
        %700 = vmatmul.mubr.f32.gmra.mrb[0].mxu0 %v630
        %v701 = vpop.f32.mrb[0].mxu0
        %v702 = vadd.f32 0.0, %v701
        %v703 = vpop.f32.mrb[0].mxu0
        %704 = vmatprep.mubr.f32.mxu0 0.0
        %705 = vmatmul.mubr.f32.gmra.mrb[0].mxu0 %v633
        %v706 = vpop.f32.mrb[0].mxu0
        %v707 = vadd.f32 0.0, %v706
        %v708 = vpop.f32.mrb[0].mxu0
        %709 = vdwg.mxu0
        %v710 = vmul.f32 %v702, %v619
        %v711 = vmul.f32 %v707, %v620
        %712 = vrot.lane.b32.xlu0 %v304, 112
        %v713 = vpop.permute.xlu0 %712
        %714 = vrot.lane.b32.xlu0 %v305, 112
        %v715 = vpop.permute.xlu0 %714
        %716 = vrot.lane.b32.xlu0 %v306, 112
        %v717 = vpop.permute.xlu0 %716
        %718 = vrot.lane.b32.xlu0 %v307, 112
        %v719 = vpop.permute.xlu0 %718
        %v720 = vsel %vm310, %v713, 0
        %v722 = vsel %vm310, %v715, 0
        %v724 = vsel %vm310, %v717, 0
        %v726 = vsel %vm310, %v719, 0
        %728 = vmatprep.subr.mxu0 0.0
        %729 = vmatpush1.xpose.msra.mxu0 %v724
        %730 = vmatprep.subr.mxu0 0.0
        %731 = vmatpush1.xpose.msra.mxu0 %v726
        %732 = vmatprep.subr.mxu0 0.0
        %733 = vmatpush1.xpose.msra.mxu0 0.0
        %734 = vmatprep.subr.mxu0 0.0
        %735 = vmatpush1.xpose.msra.mxu0 0.0
        %736 = vmatprep.subr.mxu0 0.0
        %737 = vmatpush1.xpose.msra.mxu0 0.0
        %738 = vmatprep.subr.mxu0 0.0
        %739 = vmatpush1.xpose.msra.mxu0 0.0
        %740 = vmatprep.subr.mxu0 0.0
        %741 = vmatpush1.xpose.msra.mxu0 0.0
        %742 = vmatprep.subr.mxu0 0.0
        %743 = vmatpush1.xpose.msra.mxu0 0.0
        %744 = vmatprep.subr.mxu0 0.0
        %745 = vmatpush1.xpose.msra.mxu0 0.0
        %746 = vmatprep.subr.mxu0 0.0
        %747 = vmatpush1.xpose.msra.mxu0 0.0
        %748 = vmatprep.subr.mxu0 0.0
        %749 = vmatpush1.xpose.msra.mxu0 0.0
        %750 = vmatprep.subr.mxu0 0.0
        %751 = vmatpush1.xpose.msra.mxu0 0.0
        %752 = vmatprep.subr.mxu0 0.0
        %753 = vmatpush1.xpose.msra.mxu0 0.0
        %754 = vmatprep.subr.mxu0 0.0
        %755 = vmatpush1.xpose.msra.mxu0 0.0
        %756 = vmatprep.subr.mxu0 0.0
        %757 = vmatpush1.xpose.msra.mxu0 0.0
        %758 = vmatprep.subr.mxu0 0.0
        %759 = vmatpush1.xpose.msra.mxu0 0.0
        %760 = vmatprep.subr.mxu0 0.0
        %761 = vmatpush1.xpose.msra.mxu0 0.0
        %762 = vmatprep.subr.mxu0 0.0
        %763 = vmatpush1.xpose.msra.mxu0 0.0
        %764 = vmatprep.subr.mxu0 0.0
        %765 = vmatpush1.xpose.msra.mxu0 0.0
        %766 = vmatprep.subr.mxu0 0.0
        %767 = vmatpush1.xpose.msra.mxu0 0.0
        %768 = vmatprep.subr.mxu0 0.0
        %769 = vmatpush1.xpose.msra.mxu0 0.0
        %770 = vmatprep.subr.mxu0 0.0
        %771 = vmatpush1.xpose.msra.mxu0 0.0
        %772 = vmatprep.subr.mxu0 0.0
        %773 = vmatpush1.xpose.msra.mxu0 0.0
        %774 = vmatprep.subr.mxu0 0.0
        %775 = vmatpush1.xpose.msra.mxu0 0.0
        %776 = vmatprep.subr.mxu0 0.0
        %777 = vmatpush1.xpose.msra.mxu0 0.0
        %778 = vmatprep.subr.mxu0 0.0
        %779 = vmatpush1.xpose.msra.mxu0 0.0
        %780 = vmatprep.subr.mxu0 0.0
        %781 = vmatpush1.xpose.msra.mxu0 0.0
        %782 = vmatprep.subr.mxu0 0.0
        %783 = vmatpush1.xpose.msra.mxu0 0.0
        %784 = vmatprep.subr.mxu0 0.0
        %785 = vmatpush1.xpose.msra.mxu0 0.0
        %786 = vmatprep.subr.mxu0 0.0
        %787 = vmatpush1.xpose.msra.mxu0 0.0
        %788 = vmatprep.subr.mxu0 0.0
        %789 = vmatpush1.xpose.msra.mxu0 0.0
        %790 = vmatprep.subr.mxu0 0.0
        %791 = vmatpush1.xpose.msra.mxu0 0.0
        %792 = vmatprep.mubr.f32.mxu0 0.0
        %793 = vmatmul.mubr.f32.gmra.mrb[0].mxu0 %v720
        %v794 = vpop.f32.mrb[0].mxu0
        %v795 = vadd.f32 0.0, %v794
        %v796 = vpop.f32.mrb[0].mxu0
        %797 = vmatprep.mubr.f32.mxu0 0.0
        %798 = vmatmul.mubr.f32.gmra.mrb[0].mxu0 %v722
        %v799 = vpop.f32.mrb[0].mxu0
        %v800 = vadd.f32 0.0, %v799
        %v801 = vpop.f32.mrb[0].mxu0
        %802 = vdwg.mxu0
        %v803 = vsel %vm398, %v795, -inf
        %804 = vmax.xlane.f32.xlu0 %v803
        %v805 = vpop.xlane.xlu0 %804
        %v806 = vsel %vm398, %v800, -inf
        %807 = vmax.xlane.f32.xlu0 %v806
        %v808 = vpop.xlane.xlu0 %807
        %v809 = vsub.f32 %v795, %v805
        %v810 = vsub.f32 %v800, %v808
        %v811 = vpow.pop %v809
        %v812 = vpow.pop %v810
        %v813 = vsel %vm398, %v811, 0.0
        %814 = vadd.xlane.f32.xlu0 %v813
        %v815 = vpop.xlane.xlu0 %814
        %v816 = vsel %vm398, %v812, 0.0
        %817 = vadd.xlane.f32.xlu0 %v816
        %v818 = vpop.xlane.xlu0 %817
        %v819 = vrcp.pop %v815
        %v820 = vrcp.pop %v818
        %v821 = vmul.f32 %v815, %v819
        %v822 = vmul.f32 %v818, %v820
        %v823 = vsub.f32 2.0, %v821
        %v824 = vsub.f32 2.0, %v822
        %v825 = vmul.f32 %v819, %v823
        %v826 = vmul.f32 %v820, %v824
        %827 = vrot.lane.b32.xlu0 %v308, 112
        %v828 = vpop.permute.xlu0 %827
        %829 = vrot.lane.b32.xlu0 %v309, 112
        %v830 = vpop.permute.xlu0 %829
        %v834 = vsel %vm398, %v811, 0
        %v837 = vsel %vm398, %v812, 0
        %839 = vmatprep.subr.mxu0 0.0
        %840 = vmatpush1.msra.mxu0 %v828
        %841 = vmatprep.subr.mxu0 0.0
        %842 = vmatpush1.msra.mxu0 %v830
        %843 = vmatprep.subr.mxu0 0.0
        %844 = vmatpush1.msra.mxu0 0.0
        %845 = vmatprep.subr.mxu0 0.0
        %846 = vmatpush1.msra.mxu0 0.0
        %847 = vmatprep.subr.mxu0 0.0
        %848 = vmatpush1.msra.mxu0 0.0
        %849 = vmatprep.subr.mxu0 0.0
        %850 = vmatpush1.msra.mxu0 0.0
        %851 = vmatprep.subr.mxu0 0.0
        %852 = vmatpush1.msra.mxu0 0.0
        %853 = vmatprep.subr.mxu0 0.0
        %854 = vmatpush1.msra.mxu0 0.0
        %855 = vmatprep.subr.mxu0 0.0
        %856 = vmatpush1.msra.mxu0 0.0
        %857 = vmatprep.subr.mxu0 0.0
        %858 = vmatpush1.msra.mxu0 0.0
        %859 = vmatprep.subr.mxu0 0.0
        %860 = vmatpush1.msra.mxu0 0.0
        %861 = vmatprep.subr.mxu0 0.0
        %862 = vmatpush1.msra.mxu0 0.0
        %863 = vmatprep.subr.mxu0 0.0
        %864 = vmatpush1.msra.mxu0 0.0
        %865 = vmatprep.subr.mxu0 0.0
        %866 = vmatpush1.msra.mxu0 0.0
        %867 = vmatprep.subr.mxu0 0.0
        %868 = vmatpush1.msra.mxu0 0.0
        %869 = vmatprep.subr.mxu0 0.0
        %870 = vmatpush1.msra.mxu0 0.0
        %871 = vmatprep.subr.mxu0 0.0
        %872 = vmatpush1.msra.mxu0 0.0
        %873 = vmatprep.subr.mxu0 0.0
        %874 = vmatpush1.msra.mxu0 0.0
        %875 = vmatprep.subr.mxu0 0.0
        %876 = vmatpush1.msra.mxu0 0.0
        %877 = vmatprep.subr.mxu0 0.0
        %878 = vmatpush1.msra.mxu0 0.0
        %879 = vmatprep.subr.mxu0 0.0
        %880 = vmatpush1.msra.mxu0 0.0
        %881 = vmatprep.subr.mxu0 0.0
        %882 = vmatpush1.msra.mxu0 0.0
        %883 = vmatprep.subr.mxu0 0.0
        %884 = vmatpush1.msra.mxu0 0.0
        %885 = vmatprep.subr.mxu0 0.0
        %886 = vmatpush1.msra.mxu0 0.0
        %887 = vmatprep.subr.mxu0 0.0
        %888 = vmatpush1.msra.mxu0 0.0
        %889 = vmatprep.subr.mxu0 0.0
        %890 = vmatpush1.msra.mxu0 0.0
        %891 = vmatprep.subr.mxu0 0.0
        %892 = vmatpush1.msra.mxu0 0.0
        %893 = vmatprep.subr.mxu0 0.0
        %894 = vmatpush1.msra.mxu0 0.0
        %895 = vmatprep.subr.mxu0 0.0
        %896 = vmatpush1.msra.mxu0 0.0
        %897 = vmatprep.subr.mxu0 0.0
        %898 = vmatpush1.msra.mxu0 0.0
        %899 = vmatprep.subr.mxu0 0.0
        %900 = vmatpush1.msra.mxu0 0.0
        %901 = vmatprep.subr.mxu0 0.0
        %902 = vmatpush1.msra.mxu0 0.0
        %903 = vmatprep.mubr.f32.mxu0 0.0
        %904 = vmatmul.mubr.f32.gmra.mrb[0].mxu0 %v834
        %v905 = vpop.f32.mrb[0].mxu0
        %v906 = vadd.f32 0.0, %v905
        %v907 = vpop.f32.mrb[0].mxu0
        %908 = vmatprep.mubr.f32.mxu0 0.0
        %909 = vmatmul.mubr.f32.gmra.mrb[0].mxu0 %v837
        %v910 = vpop.f32.mrb[0].mxu0
        %v911 = vadd.f32 0.0, %v910
        %v912 = vpop.f32.mrb[0].mxu0
        %913 = vdwg.mxu0
        %v914 = vmul.f32 %v906, %v825
        %v915 = vmul.f32 %v911, %v826
        %916 = vrot.lane.b32.xlu0 %v304, 104
        %v917 = vpop.permute.xlu0 %916
        %918 = vrot.lane.b32.xlu0 %v305, 104
        %v919 = vpop.permute.xlu0 %918
        %920 = vrot.lane.b32.xlu0 %v306, 104
        %v921 = vpop.permute.xlu0 %920
        %922 = vrot.lane.b32.xlu0 %v307, 104
        %v923 = vpop.permute.xlu0 %922
        %v924 = vsel %vm310, %v917, 0
        %v926 = vsel %vm310, %v919, 0
        %v928 = vsel %vm310, %v921, 0
        %v930 = vsel %vm310, %v923, 0
        %932 = vmatprep.subr.mxu0 0.0
        %933 = vmatpush1.xpose.msra.mxu0 %v928
        %934 = vmatprep.subr.mxu0 0.0
        %935 = vmatpush1.xpose.msra.mxu0 %v930
        %936 = vmatprep.subr.mxu0 0.0
        %937 = vmatpush1.xpose.msra.mxu0 0.0
        %938 = vmatprep.subr.mxu0 0.0
        %939 = vmatpush1.xpose.msra.mxu0 0.0
        %940 = vmatprep.subr.mxu0 0.0
        %941 = vmatpush1.xpose.msra.mxu0 0.0
        %942 = vmatprep.subr.mxu0 0.0
        %943 = vmatpush1.xpose.msra.mxu0 0.0
        %944 = vmatprep.subr.mxu0 0.0
        %945 = vmatpush1.xpose.msra.mxu0 0.0
        %946 = vmatprep.subr.mxu0 0.0
        %947 = vmatpush1.xpose.msra.mxu0 0.0
        %948 = vmatprep.subr.mxu0 0.0
        %949 = vmatpush1.xpose.msra.mxu0 0.0
        %950 = vmatprep.subr.mxu0 0.0
        %951 = vmatpush1.xpose.msra.mxu0 0.0
        %952 = vmatprep.subr.mxu0 0.0
        %953 = vmatpush1.xpose.msra.mxu0 0.0
        %954 = vmatprep.subr.mxu0 0.0
        %955 = vmatpush1.xpose.msra.mxu0 0.0
        %956 = vmatprep.subr.mxu0 0.0
        %957 = vmatpush1.xpose.msra.mxu0 0.0
        %958 = vmatprep.subr.mxu0 0.0
        %959 = vmatpush1.xpose.msra.mxu0 0.0
        %960 = vmatprep.subr.mxu0 0.0
        %961 = vmatpush1.xpose.msra.mxu0 0.0
        %962 = vmatprep.subr.mxu0 0.0
        %963 = vmatpush1.xpose.msra.mxu0 0.0
        %964 = vmatprep.subr.mxu0 0.0
        %965 = vmatpush1.xpose.msra.mxu0 0.0
        %966 = vmatprep.subr.mxu0 0.0
        %967 = vmatpush1.xpose.msra.mxu0 0.0
        %968 = vmatprep.subr.mxu0 0.0
        %969 = vmatpush1.xpose.msra.mxu0 0.0
        %970 = vmatprep.subr.mxu0 0.0
        %971 = vmatpush1.xpose.msra.mxu0 0.0
        %972 = vmatprep.subr.mxu0 0.0
        %973 = vmatpush1.xpose.msra.mxu0 0.0
        %974 = vmatprep.subr.mxu0 0.0
        %975 = vmatpush1.xpose.msra.mxu0 0.0
        %976 = vmatprep.subr.mxu0 0.0
        %977 = vmatpush1.xpose.msra.mxu0 0.0
        %978 = vmatprep.subr.mxu0 0.0
        %979 = vmatpush1.xpose.msra.mxu0 0.0
        %980 = vmatprep.subr.mxu0 0.0
        %981 = vmatpush1.xpose.msra.mxu0 0.0
        %982 = vmatprep.subr.mxu0 0.0
        %983 = vmatpush1.xpose.msra.mxu0 0.0
        %984 = vmatprep.subr.mxu0 0.0
        %985 = vmatpush1.xpose.msra.mxu0 0.0
        %986 = vmatprep.subr.mxu0 0.0
        %987 = vmatpush1.xpose.msra.mxu0 0.0
        %988 = vmatprep.subr.mxu0 0.0
        %989 = vmatpush1.xpose.msra.mxu0 0.0
        %990 = vmatprep.subr.mxu0 0.0
        %991 = vmatpush1.xpose.msra.mxu0 0.0
        %992 = vmatprep.subr.mxu0 0.0
        %993 = vmatpush1.xpose.msra.mxu0 0.0
        %994 = vmatprep.subr.mxu0 0.0
        %995 = vmatpush1.xpose.msra.mxu0 0.0
        %996 = vmatprep.mubr.f32.mxu0 0.0
        %997 = vmatmul.mubr.f32.gmra.mrb[0].mxu0 %v924
        %v998 = vpop.f32.mrb[0].mxu0
        %v999 = vadd.f32 0.0, %v998
        %v1000 = vpop.f32.mrb[0].mxu0
        %1001 = vmatprep.mubr.f32.mxu0 0.0
        %1002 = vmatmul.mubr.f32.gmra.mrb[0].mxu0 %v926
        %v1003 = vpop.f32.mrb[0].mxu0
        %v1004 = vadd.f32 0.0, %v1003
        %v1005 = vpop.f32.mrb[0].mxu0
        %1006 = vdwg.mxu0
        %v1007 = vsel %vm398, %v999, -inf
        %1008 = vmax.xlane.f32.xlu0 %v1007
        %v1009 = vpop.xlane.xlu0 %1008
        %v1010 = vsel %vm398, %v1004, -inf
        %1011 = vmax.xlane.f32.xlu0 %v1010
        %v1012 = vpop.xlane.xlu0 %1011
        %v1013 = vsub.f32 %v999, %v1009
        %v1014 = vsub.f32 %v1004, %v1012
        %v1015 = vpow.pop %v1013
        %v1016 = vpow.pop %v1014
        %v1017 = vsel %vm398, %v1015, 0.0
        %1018 = vadd.xlane.f32.xlu0 %v1017
        %v1019 = vpop.xlane.xlu0 %1018
        %v1020 = vsel %vm398, %v1016, 0.0
        %1021 = vadd.xlane.f32.xlu0 %v1020
        %v1022 = vpop.xlane.xlu0 %1021
        %v1023 = vrcp.pop %v1019
        %v1024 = vrcp.pop %v1022
        %v1025 = vmul.f32 %v1019, %v1023
        %v1026 = vmul.f32 %v1022, %v1024
        %v1027 = vsub.f32 2.0, %v1025
        %v1028 = vsub.f32 2.0, %v1026
        %v1029 = vmul.f32 %v1023, %v1027
        %v1030 = vmul.f32 %v1024, %v1028
        %1031 = vrot.lane.b32.xlu0 %v308, 104
        %v1032 = vpop.permute.xlu0 %1031
        %1033 = vrot.lane.b32.xlu0 %v309, 104
        %v1034 = vpop.permute.xlu0 %1033
        %v1038 = vsel %vm398, %v1015, 0
        %v1041 = vsel %vm398, %v1016, 0
        %1043 = vmatprep.subr.mxu0 0.0
        %1044 = vmatpush1.msra.mxu0 %v1032
        %1045 = vmatprep.subr.mxu0 0.0
        %1046 = vmatpush1.msra.mxu0 %v1034
        %1047 = vmatprep.subr.mxu0 0.0
        %1048 = vmatpush1.msra.mxu0 0.0
        %1049 = vmatprep.subr.mxu0 0.0
        %1050 = vmatpush1.msra.mxu0 0.0
        %1051 = vmatprep.subr.mxu0 0.0
        %1052 = vmatpush1.msra.mxu0 0.0
        %1053 = vmatprep.subr.mxu0 0.0
        %1054 = vmatpush1.msra.mxu0 0.0
        %1055 = vmatprep.subr.mxu0 0.0
        %1056 = vmatpush1.msra.mxu0 0.0
        %1057 = vmatprep.subr.mxu0 0.0
        %1058 = vmatpush1.msra.mxu0 0.0
        %1059 = vmatprep.subr.mxu0 0.0
        %1060 = vmatpush1.msra.mxu0 0.0
        %1061 = vmatprep.subr.mxu0 0.0
        %1062 = vmatpush1.msra.mxu0 0.0
        %1063 = vmatprep.subr.mxu0 0.0
        %1064 = vmatpush1.msra.mxu0 0.0
        %1065 = vmatprep.subr.mxu0 0.0
        %1066 = vmatpush1.msra.mxu0 0.0
        %1067 = vmatprep.subr.mxu0 0.0
        %1068 = vmatpush1.msra.mxu0 0.0
        %1069 = vmatprep.subr.mxu0 0.0
        %1070 = vmatpush1.msra.mxu0 0.0
        %1071 = vmatprep.subr.mxu0 0.0
        %1072 = vmatpush1.msra.mxu0 0.0
        %1073 = vmatprep.subr.mxu0 0.0
        %1074 = vmatpush1.msra.mxu0 0.0
        %1075 = vmatprep.subr.mxu0 0.0
        %1076 = vmatpush1.msra.mxu0 0.0
        %1077 = vmatprep.subr.mxu0 0.0
        %1078 = vmatpush1.msra.mxu0 0.0
        %1079 = vmatprep.subr.mxu0 0.0
        %1080 = vmatpush1.msra.mxu0 0.0
        %1081 = vmatprep.subr.mxu0 0.0
        %1082 = vmatpush1.msra.mxu0 0.0
        %1083 = vmatprep.subr.mxu0 0.0
        %1084 = vmatpush1.msra.mxu0 0.0
        %1085 = vmatprep.subr.mxu0 0.0
        %1086 = vmatpush1.msra.mxu0 0.0
        %1087 = vmatprep.subr.mxu0 0.0
        %1088 = vmatpush1.msra.mxu0 0.0
        %1089 = vmatprep.subr.mxu0 0.0
        %1090 = vmatpush1.msra.mxu0 0.0
        %1091 = vmatprep.subr.mxu0 0.0
        %1092 = vmatpush1.msra.mxu0 0.0
        %1093 = vmatprep.subr.mxu0 0.0
        %1094 = vmatpush1.msra.mxu0 0.0
        %1095 = vmatprep.subr.mxu0 0.0
        %1096 = vmatpush1.msra.mxu0 0.0
        %1097 = vmatprep.subr.mxu0 0.0
        %1098 = vmatpush1.msra.mxu0 0.0
        %1099 = vmatprep.subr.mxu0 0.0
        %1100 = vmatpush1.msra.mxu0 0.0
        %1101 = vmatprep.subr.mxu0 0.0
        %1102 = vmatpush1.msra.mxu0 0.0
        %1103 = vmatprep.subr.mxu0 0.0
        %1104 = vmatpush1.msra.mxu0 0.0
        %1105 = vmatprep.subr.mxu0 0.0
        %1106 = vmatpush1.msra.mxu0 0.0
        %1107 = vmatprep.mubr.f32.mxu0 0.0
        %1108 = vmatmul.mubr.f32.gmra.mrb[0].mxu0 %v1038
        %v1109 = vpop.f32.mrb[0].mxu0
        %v1110 = vadd.f32 0.0, %v1109
        %v1111 = vpop.f32.mrb[0].mxu0
        %1112 = vmatprep.mubr.f32.mxu0 0.0
        %1113 = vmatmul.mubr.f32.gmra.mrb[0].mxu0 %v1041
        %v1114 = vpop.f32.mrb[0].mxu0
        %v1115 = vadd.f32 0.0, %v1114
        %v1116 = vpop.f32.mrb[0].mxu0
        %1117 = vdwg.mxu0
        %v1118 = vmul.f32 %v1110, %v1029
        %v1119 = vmul.f32 %v1115, %v1030
        %1122 = vrot.lane.b32.xlu0 %v710, 8
        %v1123 = vpop.permute.xlu0 %1122
        %1124 = vrot.lane.b32.xlu0 %v711, 8
        %v1125 = vpop.permute.xlu0 %1124
        %1130 = vrot.lane.b32.xlu0 %v914, 16
        %v1131 = vpop.permute.xlu0 %1130
        %1132 = vrot.lane.b32.xlu0 %v915, 16
        %v1133 = vpop.permute.xlu0 %1132
        %1138 = vrot.lane.b32.xlu0 %v1118, 24
        %v1139 = vpop.permute.xlu0 %1138
        %1140 = vrot.lane.b32.xlu0 %v1119, 24
        %v1141 = vpop.permute.xlu0 %1140
        %v1144 = vsel %vm310, %v504, %v1123
        %v1145 = vsel %vm310, %v505, %v1125
        %v1146 = vsel %vm398, %v1144, %v1131
        %v1147 = vsel %vm398, %v1145, %v1133
        %vm1148 = vcmask 195584
        %v1149 = vsel %vm1148, %v1146, %v1139
        %v1150 = vsel %vm1148, %v1147, %v1141
        %vm1151 = vcmask 261120
        %1152 = vst.msk [vmem:[%s301] sm:$0xff] %vm1151, %v1149
        %1153 = vst.msk [vmem:[%s301 + $0x8] sm:$0xff] %vm1151, %v1150
        %s1154 = sand.u32 %s140, 1
        %s1155 = scalar_lea.sflag [#allocation4], %s1154
        %s1156 = sand.u32 %s140, 1
        %s1157 = smul.addr %s1156, 16
        %s1158 = scalar_lea.vmem [#allocation8], %s1157
        // Predicated region
        $region45: #{tpu_custom_call.1} parent=31 // pred_check
          %p1159 = pneg %p150
        $region46: #{tpu_custom_call.1} parent=31 // pred_check_branch
          %1161 = sbr.rel (%p1159) target = $region48
        $region47: #{tpu_custom_call.1} parent=31 // pred_region
          %s1162 = smul.u32 2, %s30
          %s1164 = ssub.s32 256, 256
          %1165 = vsyncadd %s1155, %s1164
          %s1166 = sadd.s32 %s29, %s1162
          %s1167 = smul.addr %s28, 2
          %s1168 = sadd.s32 %s1166, %s1167
          %s1169 = smul.addr %s1168, 128
          %s1170 = scalar_lea.hbm %s3, %s1169
          %s1171 = sshll.u32 %s1158, 4
          %s1172 = int_to_ptr.vmem [resolvable:$true] %s1171
          %1177 = dma.vmem_to_hbm [thread:$0]  %s1172, 256, %s1170, %s1155, 128, 128, 8
        $region48: #{tpu_custom_call.1} parent=31 // pred_fallthru
          _
      $region32: #{tpu_custom_call.1} parent=5 // pred_fallthru
        _
      %p1178 = scmp.le.s32.totalorder 2, %s18
      // Predicated region
      $region49: #{tpu_custom_call.1} parent=5 // pred_check
        %p1179 = pneg %p1178
      $region50: #{tpu_custom_call.1} parent=5 // pred_check_branch
        %1181 = sbr.rel (%p1179) target = $region52
      $region51: #{tpu_custom_call.1} parent=5 // pred_region
        %s1182 = ssub.s32 %s18, 2
        // Predicated region
        $region53: #{tpu_custom_call.1} parent=51 // pred_check
          %p1183 = pneg %p156
        $region54: #{tpu_custom_call.1} parent=51 // pred_check_branch
          %1185 = sbr.rel (%p1183) target = $region56
        $region55: #{tpu_custom_call.1} parent=51 // pred_region
          %s1186 = sand.u32 %s141, 1
          %s1187 = scalar_lea.sflag [#allocation4], %s1186
          %s1188 = sand.u32 %s141, 1
          %s1189 = smul.addr %s1188, 16
          %s1190 = scalar_lea.vmem [#allocation8], %s1189
          %1191 = dma.done %s1187, 256
        $region56: #{tpu_custom_call.1} parent=51 // pred_fallthru
          _
      $region52: #{tpu_custom_call.1} parent=5 // pred_fallthru
        _
    $region6: #{tpu_custom_call.1} parent=1 // loop_footer
      %s22 = sadd.s32 1, %s18
    $region7: #{tpu_custom_call.1} parent=1 // loop_footer_branch
      %17 = sbr.rel target = $region3
    $region8: #{tpu_custom_call.1} parent=1 // loop_exit
      _
    %1192 = vsyncpa [#allocation3], 1
    %s1193 = scalar_lea.sflag [#allocation3], 1
    %1194 = vsyncpa %s1193, 1
    %1195 = vsyncpa [#allocation6], 1
    %s1196 = scalar_lea.sflag [#allocation6], 1
    %1197 = vsyncpa %s1196, 1
    %1198 = vsyncpa [#allocation4], 1
    %s1199 = scalar_lea.sflag [#allocation4], 1
    %1200 = vsyncpa %s1199, 1

</llo_original>
